<compile_context>
chip_gen: v7x
topology: tpu7x:2x2x1
jax: 0.10.0
libtpu: 0.0.40
codegen_flags: <defaults>
</compile_context>

<pallas_src>
import jax
import jax.numpy as jnp
from jax.experimental import pallas as pl
from jax.experimental.pallas import tpu as pltpu

IN_FEATURES = 784
OUT_FEATURES = 10


def _round_up(n, m):
    return ((n + m - 1) // m) * m


def linear_kernel(x_ref, w_ref, b_ref, o_ref):
    compute_dtype = w_ref.dtype
    # In-kernel cast of the streamed activations (no-op if dtypes already match).
    x = x_ref[...].astype(compute_dtype)
    # Full-precision MXU path when computing in f32; native bf16 otherwise.
    prec = jax.lax.Precision.HIGHEST if compute_dtype == jnp.float32 else None
    acc = jnp.dot(x, w_ref[...], preferred_element_type=jnp.float32, precision=prec)
    o_ref[...] = (acc + b_ref[...]).astype(o_ref.dtype)


def simple_net_forward(x, w, b, *, block_b=2048, compute_dtype=jnp.bfloat16):
    """y = x @ w.T + b  (equivalent to PyTorch nn.Linear(784, 10).forward).

    Args:
      x: [B, 784] activations (streamed in their own dtype; cast in-kernel).
      w: [10, 784] weight (PyTorch [out, in] convention).
      b: [10] bias.
      block_b: batch tile size (rows per grid step).
      compute_dtype: dtype fed to the MXU (bf16 default; accumulation is f32).
    """
    B = x.shape[0]
    out_dtype = x.dtype

    # Weight / bias are tiny one-time preps (~8 KiB): transpose + cast here.
    w_t = w.T.astype(compute_dtype)                       # [784, 10]
    b2 = b.reshape(1, OUT_FEATURES).astype(jnp.float32)   # [1, 10]

    # Batch tile: multiple of 8 sublanes. Ragged last tile handled by the
    # cdiv grid + Pallas edge-block masking -> no wrapper pad/slice on x or y.
    tb = min(block_b, _round_up(B, 8))
    grid = (pl.cdiv(B, tb),)

    # VMEM footprint: double-buffered x and out blocks + resident W/bias.
    x_itemsize = jnp.dtype(x.dtype).itemsize
    o_itemsize = jnp.dtype(out_dtype).itemsize
    w_itemsize = jnp.dtype(compute_dtype).itemsize
    x_blk_bytes = tb * IN_FEATURES * x_itemsize
    o_blk_bytes = tb * OUT_FEATURES * o_itemsize
    w_bytes = IN_FEATURES * OUT_FEATURES * w_itemsize + OUT_FEATURES * 4
    vmem_needed = 2 * (x_blk_bytes + o_blk_bytes) + 2 * w_bytes
    # Leave headroom; never below 16 MiB, never above a safe 48 MiB ceiling
    # (v7x physical VMEM is 64 MiB per TensorCore).
    vmem_limit = int(min(max(vmem_needed + (4 << 20), 16 << 20), 48 << 20))

    out = pl.pallas_call(
        linear_kernel,
        out_shape=jax.ShapeDtypeStruct((B, OUT_FEATURES), out_dtype),
        grid=grid,
        in_specs=[
            # x: tiled along batch, auto double-buffered / pipelined by Pallas.
            pl.BlockSpec((tb, IN_FEATURES), lambda i: (i, 0)),
            # W, bias: constant index_map -> VMEM-resident across grid steps.
            pl.BlockSpec((IN_FEATURES, OUT_FEATURES), lambda i: (0, 0)),
            pl.BlockSpec((1, OUT_FEATURES), lambda i: (0, 0)),
        ],
        out_specs=pl.BlockSpec((tb, OUT_FEATURES), lambda i: (i, 0)),
        compiler_params=pltpu.CompilerParams(
            dimension_semantics=("parallel",),
            vmem_limit_bytes=vmem_limit,
        ),
        cost_estimate=pl.CostEstimate(
            flops=2 * B * IN_FEATURES * OUT_FEATURES,
            transcendentals=0,
            bytes_accessed=(
                B * IN_FEATURES * x_itemsize            # x (caller dtype)
                + IN_FEATURES * OUT_FEATURES * w_itemsize  # W
                + OUT_FEATURES * 4                         # bias
                + B * OUT_FEATURES * o_itemsize            # y (unpadded)
            ),
        ),
    )(x, w_t, b2)
    return out


def init_params(key):
    # Deterministic init mimicking nn.Linear's uniform(-1/sqrt(in), 1/sqrt(in)).
    k_w, k_b = jax.random.split(key)
    bound = 1.0 / jnp.sqrt(jnp.float32(IN_FEATURES))
    w = jax.random.uniform(
        k_w, (OUT_FEATURES, IN_FEATURES), jnp.float32, minval=-bound, maxval=bound
    )
    b = jax.random.uniform(
        k_b, (OUT_FEATURES,), jnp.float32, minval=-bound, maxval=bound
    )
    return w, b


if __name__ == "__main__":
    key = jax.random.PRNGKey(0)
    k_x, k_p, k_x2 = jax.random.split(key, 3)

    w, b = init_params(k_p)

    # Small demo batch: single grid step.
    batch = 8
    x = jax.random.normal(k_x, (batch, IN_FEATURES), jnp.float32)
    y_ref = x @ w.T + b

    # f32 compute path: tight check of the kernel structure.
    y_f32 = jax.block_until_ready(
        simple_net_forward(x, w, b, compute_dtype=jnp.float32)
    )
    assert y_f32.shape == (batch, OUT_FEATURES)
    assert y_f32.dtype == x.dtype
    assert jnp.allclose(y_f32, y_ref, atol=1e-4, rtol=1e-4)

    # bf16 compute path (fast default, in-kernel cast): looser tolerance.
    y_bf16 = jax.block_until_ready(simple_net_forward(x, w, b))
    assert y_bf16.shape == (batch, OUT_FEATURES)
    assert jnp.allclose(y_bf16, y_ref, atol=5e-2, rtol=5e-2)

    # Multi-step grid with a ragged last tile (200 rows, tile 64 -> 4 steps,
    # last step masked): exercises the cdiv-grid / edge-masking path.
    batch2 = 200
    x2 = jax.random.normal(k_x2, (batch2, IN_FEATURES), jnp.float32)
    y2_ref = x2 @ w.T + b
    y2 = jax.block_until_ready(
        simple_net_forward(x2, w, b, block_b=64, compute_dtype=jnp.float32)
    )
    assert y2.shape == (batch2, OUT_FEATURES)
    assert jnp.allclose(y2, y2_ref, atol=1e-4, rtol=1e-4)

    print("KERNEL_OK")
</pallas_src>

<mosaic_0001>
module attributes {stable_mosaic.version = 11 : i64} {
  func.func @linear_kernel(%arg0: i32, %arg1: memref<8x784xf32, #tpu.memory_space<vmem>>, %arg2: memref<784x10xf32, #tpu.memory_space<vmem>>, %arg3: memref<1x10xf32, #tpu.memory_space<vmem>>, %arg4: memref<8x10xf32, #tpu.memory_space<vmem>>) attributes {dimension_semantics = [#tpu.dimension_semantics<parallel>], iteration_bounds = array<i64: 1>, scalar_prefetch = 0 : i64, scratch_operands = 0 : i64, tpu.core_type = #tpu.core_type<tc>, window_params = [{transform_indices = @transform_0, window_bounds = array<i64: 8, 784>}, {pipeline_mode = #tpu.pipeline_mode<synchronous>, transform_indices = @transform_1, window_bounds = array<i64: 784, 10>}, {pipeline_mode = #tpu.pipeline_mode<synchronous>, transform_indices = @transform_2, window_bounds = array<i64: 1, 10>}, {transform_indices = @transform_3, window_bounds = array<i64: 8, 10>}]} {
    %c0 = arith.constant 0 : index
    %c0_0 = arith.constant 0 : index
    %0 = vector.load %arg1[%c0, %c0_0] : memref<8x784xf32, #tpu.memory_space<vmem>>, vector<8x784xf32>
    %c0_1 = arith.constant 0 : index
    %c0_2 = arith.constant 0 : index
    %1 = vector.load %arg2[%c0_1, %c0_2] : memref<784x10xf32, #tpu.memory_space<vmem>>, vector<784x10xf32>
    %cst = arith.constant dense<0.000000e+00> : vector<8x10xf32>
    %2 = tpu.matmul %0, %1, %cst {dimension_numbers = #tpu.dot_dimension_numbers<[1], [0], [0], [1], [0, 0, 1, 1], [], []>, precision = #tpu.contract_precision<fp32>} : vector<8x784xf32>, vector<784x10xf32>, vector<8x10xf32> -> vector<8x10xf32>
    %c0_3 = arith.constant 0 : index
    %c0_4 = arith.constant 0 : index
    %3 = vector.load %arg3[%c0_3, %c0_4] : memref<1x10xf32, #tpu.memory_space<vmem>>, vector<1x10xf32>
    %4 = vector.broadcast %3 : vector<1x10xf32> to vector<8x10xf32>
    %5 = arith.addf %2, %4 : vector<8x10xf32>
    %c0_5 = arith.constant 0 : index
    %c0_6 = arith.constant 0 : index
    %6 = vector.load %arg4[%c0_5, %c0_6] : memref<8x10xf32, #tpu.memory_space<vmem>>, vector<8x10xf32>
    tpu.vector_store %arg4[%c0_5, %c0_6], %5 {strides = array<i32>} : memref<8x10xf32, #tpu.memory_space<vmem>>, vector<8x10xf32>,
    return
  }
  func.func @transform_0(%arg0: i32) -> (i32, i32) {
    %c0_i32 = arith.constant 0 : i32
    %c0_i32_0 = arith.constant 0 : i32
    return %arg0, %c0_i32 : i32, i32
  }
  func.func @transform_1(%arg0: i32) -> (i32, i32) {
    %c0_i32 = arith.constant 0 : i32
    %c0_i32_0 = arith.constant 0 : i32
    %c0_i32_1 = arith.constant 0 : i32
    return %c0_i32, %c0_i32_0 : i32, i32
  }
  func.func @transform_2(%arg0: i32) -> (i32, i32) {
    %c0_i32 = arith.constant 0 : i32
    %c0_i32_0 = arith.constant 0 : i32
    %c0_i32_1 = arith.constant 0 : i32
    return %c0_i32, %c0_i32_0 : i32, i32
  }
  func.func @transform_3(%arg0: i32) -> (i32, i32) {
    %c0_i32 = arith.constant 0 : i32
    %c0_i32_0 = arith.constant 0 : i32
    return %arg0, %c0_i32 : i32, i32
  }
}

</mosaic_0001>

<llo_original>
// kernel: tpu_custom_call.1
$region0: #{tpu_custom_call.1}
  #allocation0 [shape = 'u32[]', space=smem, size = 0x4, offset = 0x4, fixed_abs, tag = 'smem constant byte address 0x4 - core index']
  #allocation1 [shape = 'u32[144,128]{1,0:T(1,128)}', space=vmem, size = 0x12000, scoped, tag = 'internal scratch']
  %s0 = inlined_call_operand.vmem [shape: f32[8,784], index: 0, kind: input, shape index: {}]
  %s1 = inlined_call_operand.vmem [shape: f32[784,10], index: 1, kind: input, shape index: {}]
  %s2 = inlined_call_operand.vmem [shape: f32[1,10], index: 2, kind: input, shape index: {}]
  %s3 = inlined_call_operand.hbm [shape: f32[8,10], index: 3, kind: output, shape index: {}]
  %s4 = sld [smem:[#allocation0]]
  $region22: #{tpu_custom_call.1} parent=0
    _
  %s6 = ssub.s32 1, %s4
  %s7 = scalar_select 0, %s6, %s4
  $region1: #{tpu_custom_call.1} parent=0
    #allocation2 [shape = 'u8[4096]{0}', space=vmem, size = 0x1000, scoped, tag = 'output window, operand 0, single buffered']
    #allocation3 [shape = 's32[1]{0}', space=sflag, size = 0x4, scoped, tag = 'scoped memory for tpu_custom_call.1']
    %8 = vsyncpa [#allocation3], 0
    // Predicated region
    $region2: #{tpu_custom_call.1} parent=1 // pred_check
      _
    $region3: #{tpu_custom_call.1} parent=1 // pred_check_branch
      %10 = sbr.rel (0) target = $region5
    $region4: #{tpu_custom_call.1} parent=1 // pred_region
      _
    $region5: #{tpu_custom_call.1} parent=1 // pred_fallthru
      _
    // Predicated region
    $region6: #{tpu_custom_call.1} parent=1 // pred_check
      _
    $region7: #{tpu_custom_call.1} parent=1 // pred_check_branch
      %12 = sbr.rel (0) target = $region9
    $region8: #{tpu_custom_call.1} parent=1 // pred_region
      _
    $region9: #{tpu_custom_call.1} parent=1 // pred_fallthru
      _
    // Predicated region
    $region10: #{tpu_custom_call.1} parent=1 // pred_check
      _
    $region11: #{tpu_custom_call.1} parent=1 // pred_check_branch
      %14 = sbr.rel (0) target = $region13
    $region12: #{tpu_custom_call.1} parent=1 // pred_region
      _
    $region13: #{tpu_custom_call.1} parent=1 // pred_fallthru
      _
    %v15 = vld [vmem:[%s0] sm:$0xff]
    %v16 = vld [vmem:[%s0 + $0x8] sm:$0xff]
    %v17 = vld [vmem:[%s0 + $0x10] sm:$0xff]
    %v18 = vld [vmem:[%s0 + $0x18] sm:$0xff]
    %v19 = vld [vmem:[%s0 + $0x20] sm:$0xff]
    %v20 = vld [vmem:[%s0 + $0x28] sm:$0xff]
    %v21 = vld [vmem:[%s0 + $0x30] sm:$0xff]
    %v22 = vld [vmem:[%s1] sm:$0xff]
    %v23 = vld [vmem:[%s1 + $0x8] sm:$0xff]
    %v24 = vld [vmem:[%s1 + $0x10] sm:$0xff]
    %v25 = vld [vmem:[%s1 + $0x18] sm:$0xff]
    %v26 = vld [vmem:[%s1 + $0x20] sm:$0xff]
    %v27 = vld [vmem:[%s1 + $0x28] sm:$0xff]
    %v28 = vld [vmem:[%s1 + $0x30] sm:$0xff]
    %v29 = vld [vmem:[%s1 + $0x38] sm:$0xff]
    %v30 = vld [vmem:[%s1 + $0x40] sm:$0xff]
    %v31 = vld [vmem:[%s1 + $0x48] sm:$0xff]
    %v32 = vld [vmem:[%s1 + $0x50] sm:$0xff]
    %v33 = vld [vmem:[%s1 + $0x58] sm:$0xff]
    %v34 = vld [vmem:[%s1 + $0x60] sm:$0xff]
    %v35 = vld [vmem:[%s1 + $0x68] sm:$0xff]
    %v36 = vld [vmem:[%s1 + $0x70] sm:$0xff]
    %v37 = vld [vmem:[%s1 + $0x78] sm:$0xff]
    %v38 = vld [vmem:[%s1 + $0x80] sm:$0xff]
    %v39 = vld [vmem:[%s1 + $0x88] sm:$0xff]
    %v40 = vld [vmem:[%s1 + $0x90] sm:$0xff]
    %v41 = vld [vmem:[%s1 + $0x98] sm:$0xff]
    %v42 = vld [vmem:[%s1 + $0xa0] sm:$0xff]
    %v43 = vld [vmem:[%s1 + $0xa8] sm:$0xff]
    %v44 = vld [vmem:[%s1 + $0xb0] sm:$0xff]
    %v45 = vld [vmem:[%s1 + $0xb8] sm:$0xff]
    %v46 = vld [vmem:[%s1 + $0xc0] sm:$0xff]
    %v47 = vld [vmem:[%s1 + $0xc8] sm:$0xff]
    %v48 = vld [vmem:[%s1 + $0xd0] sm:$0xff]
    %v49 = vld [vmem:[%s1 + $0xd8] sm:$0xff]
    %v50 = vld [vmem:[%s1 + $0xe0] sm:$0xff]
    %v51 = vld [vmem:[%s1 + $0xe8] sm:$0xff]
    %v52 = vld [vmem:[%s1 + $0xf0] sm:$0xff]
    %v53 = vld [vmem:[%s1 + $0xf8] sm:$0xff]
    %v54 = vld [vmem:[%s1 + $0x100] sm:$0xff]
    %v55 = vld [vmem:[%s1 + $0x108] sm:$0xff]
    %v56 = vld [vmem:[%s1 + $0x110] sm:$0xff]
    %v57 = vld [vmem:[%s1 + $0x118] sm:$0xff]
    %v58 = vld [vmem:[%s1 + $0x120] sm:$0xff]
    %v59 = vld [vmem:[%s1 + $0x128] sm:$0xff]
    %v60 = vld [vmem:[%s1 + $0x130] sm:$0xff]
    %v61 = vld [vmem:[%s1 + $0x138] sm:$0xff]
    %v62 = vld [vmem:[%s1 + $0x140] sm:$0xff]
    %v63 = vld [vmem:[%s1 + $0x148] sm:$0xff]
    %v64 = vld [vmem:[%s1 + $0x150] sm:$0xff]
    %v65 = vld [vmem:[%s1 + $0x158] sm:$0xff]
    %v66 = vld [vmem:[%s1 + $0x160] sm:$0xff]
    %v67 = vld [vmem:[%s1 + $0x168] sm:$0xff]
    %v68 = vld [vmem:[%s1 + $0x170] sm:$0xff]
    %v69 = vld [vmem:[%s1 + $0x178] sm:$0xff]
    %v70 = vld [vmem:[%s1 + $0x180] sm:$0xff]
    %v71 = vld [vmem:[%s1 + $0x188] sm:$0xff]
    %v72 = vld [vmem:[%s1 + $0x190] sm:$0xff]
    %v73 = vld [vmem:[%s1 + $0x198] sm:$0xff]
    %v74 = vld [vmem:[%s1 + $0x1a0] sm:$0xff]
    %v75 = vld [vmem:[%s1 + $0x1a8] sm:$0xff]
    %v76 = vld [vmem:[%s1 + $0x1b0] sm:$0xff]
    %v77 = vld [vmem:[%s1 + $0x1b8] sm:$0xff]
    %v78 = vld [vmem:[%s1 + $0x1c0] sm:$0xff]
    %v79 = vld [vmem:[%s1 + $0x1c8] sm:$0xff]
    %v80 = vld [vmem:[%s1 + $0x1d0] sm:$0xff]
    %v81 = vld [vmem:[%s1 + $0x1d8] sm:$0xff]
    %v82 = vld [vmem:[%s1 + $0x1e0] sm:$0xff]
    %v83 = vld [vmem:[%s1 + $0x1e8] sm:$0xff]
    %v84 = vld [vmem:[%s1 + $0x1f0] sm:$0xff]
    %v85 = vld [vmem:[%s1 + $0x1f8] sm:$0xff]
    %v86 = vld [vmem:[%s1 + $0x200] sm:$0xff]
    %v87 = vld [vmem:[%s1 + $0x208] sm:$0xff]
    %v88 = vld [vmem:[%s1 + $0x210] sm:$0xff]
    %v89 = vld [vmem:[%s1 + $0x218] sm:$0xff]
    %v90 = vld [vmem:[%s1 + $0x220] sm:$0xff]
    %v91 = vld [vmem:[%s1 + $0x228] sm:$0xff]
    %v92 = vld [vmem:[%s1 + $0x230] sm:$0xff]
    %v93 = vld [vmem:[%s1 + $0x238] sm:$0xff]
    %v94 = vld [vmem:[%s1 + $0x240] sm:$0xff]
    %v95 = vld [vmem:[%s1 + $0x248] sm:$0xff]
    %v96 = vld [vmem:[%s1 + $0x250] sm:$0xff]
    %v97 = vld [vmem:[%s1 + $0x258] sm:$0xff]
    %v98 = vld [vmem:[%s1 + $0x260] sm:$0xff]
    %v99 = vld [vmem:[%s1 + $0x268] sm:$0xff]
    %v100 = vld [vmem:[%s1 + $0x270] sm:$0xff]
    %v101 = vld [vmem:[%s1 + $0x278] sm:$0xff]
    %v102 = vld [vmem:[%s1 + $0x280] sm:$0xff]
    %v103 = vld [vmem:[%s1 + $0x288] sm:$0xff]
    %v104 = vld [vmem:[%s1 + $0x290] sm:$0xff]
    %v105 = vld [vmem:[%s1 + $0x298] sm:$0xff]
    %v106 = vld [vmem:[%s1 + $0x2a0] sm:$0xff]
    %v107 = vld [vmem:[%s1 + $0x2a8] sm:$0xff]
    %v108 = vld [vmem:[%s1 + $0x2b0] sm:$0xff]
    %v109 = vld [vmem:[%s1 + $0x2b8] sm:$0xff]
    %v110 = vld [vmem:[%s1 + $0x2c0] sm:$0xff]
    %v111 = vld [vmem:[%s1 + $0x2c8] sm:$0xff]
    %v112 = vld [vmem:[%s1 + $0x2d0] sm:$0xff]
    %v113 = vld [vmem:[%s1 + $0x2d8] sm:$0xff]
    %v114 = vld [vmem:[%s1 + $0x2e0] sm:$0xff]
    %v115 = vld [vmem:[%s1 + $0x2e8] sm:$0xff]
    %v116 = vld [vmem:[%s1 + $0x2f0] sm:$0xff]
    %v117 = vld [vmem:[%s1 + $0x2f8] sm:$0xff]
    %v118 = vld [vmem:[%s1 + $0x300] sm:$0xff]
    %v119 = vld [vmem:[%s1 + $0x308] sm:$0xff]
    %v120 = vld [vmem:[%s2] sm:$0x1]
    %v122 = vlaneseq
    %v123 = vshrl.u32 %v122, 7
    %v124 = vsub.s32 0, %v123
    %v125 = vrot.slane %v120, %v124
    %vm127 = vcmask 130048
    %v129 = vsel %vm127, %v21, 0
    %131 = vmatprep.subr.mxu0 0.0
    %v132 = vand.u32 %v22, 4294901760
    %133 = vmatpush1.msra.mxu0 %v132
    %134 = vmatprep.subr.mxu0 0.0
    %v135 = vand.u32 %v23, 4294901760
    %136 = vmatpush1.msra.mxu0 %v135
    %137 = vmatprep.subr.mxu0 0.0
    %v138 = vand.u32 %v24, 4294901760
    %139 = vmatpush1.msra.mxu0 %v138
    %140 = vmatprep.subr.mxu0 0.0
    %v141 = vand.u32 %v25, 4294901760
    %142 = vmatpush1.msra.mxu0 %v141
    %143 = vmatprep.subr.mxu0 0.0
    %v144 = vand.u32 %v26, 4294901760
    %145 = vmatpush1.msra.mxu0 %v144
    %146 = vmatprep.subr.mxu0 0.0
    %v147 = vand.u32 %v27, 4294901760
    %148 = vmatpush1.msra.mxu0 %v147
    %149 = vmatprep.subr.mxu0 0.0
    %v150 = vand.u32 %v28, 4294901760
    %151 = vmatpush1.msra.mxu0 %v150
    %152 = vmatprep.subr.mxu0 0.0
    %v153 = vand.u32 %v29, 4294901760
    %154 = vmatpush1.msra.mxu0 %v153
    %155 = vmatprep.subr.mxu0 0.0
    %v156 = vand.u32 %v30, 4294901760
    %157 = vmatpush1.msra.mxu0 %v156
    %158 = vmatprep.subr.mxu0 0.0
    %v159 = vand.u32 %v31, 4294901760
    %160 = vmatpush1.msra.mxu0 %v159
    %161 = vmatprep.subr.mxu0 0.0
    %v162 = vand.u32 %v32, 4294901760
    %163 = vmatpush1.msra.mxu0 %v162
    %164 = vmatprep.subr.mxu0 0.0
    %v165 = vand.u32 %v33, 4294901760
    %166 = vmatpush1.msra.mxu0 %v165
    %167 = vmatprep.subr.mxu0 0.0
    %v168 = vand.u32 %v34, 4294901760
    %169 = vmatpush1.msra.mxu0 %v168
    %170 = vmatprep.subr.mxu0 0.0
    %v171 = vand.u32 %v35, 4294901760
    %172 = vmatpush1.msra.mxu0 %v171
    %173 = vmatprep.subr.mxu0 0.0
    %v174 = vand.u32 %v36, 4294901760
    %175 = vmatpush1.msra.mxu0 %v174
    %176 = vmatprep.subr.mxu0 0.0
    %v177 = vand.u32 %v37, 4294901760
    %178 = vmatpush1.msra.mxu0 %v177
    %179 = vmatprep.subr.mxu0 0.0
    %v180 = vand.u32 %v38, 4294901760
    %181 = vmatpush1.msra.mxu0 %v180
    %182 = vmatprep.subr.mxu0 0.0
    %v183 = vand.u32 %v39, 4294901760
    %184 = vmatpush1.msra.mxu0 %v183
    %185 = vmatprep.subr.mxu0 0.0
    %v186 = vand.u32 %v40, 4294901760
    %187 = vmatpush1.msra.mxu0 %v186
    %188 = vmatprep.subr.mxu0 0.0
    %v189 = vand.u32 %v41, 4294901760
    %190 = vmatpush1.msra.mxu0 %v189
    %191 = vmatprep.subr.mxu0 0.0
    %v192 = vand.u32 %v42, 4294901760
    %193 = vmatpush1.msra.mxu0 %v192
    %194 = vmatprep.subr.mxu0 0.0
    %v195 = vand.u32 %v43, 4294901760
    %196 = vmatpush1.msra.mxu0 %v195
    %197 = vmatprep.subr.mxu0 0.0
    %v198 = vand.u32 %v44, 4294901760
    %199 = vmatpush1.msra.mxu0 %v198
    %200 = vmatprep.subr.mxu0 0.0
    %v201 = vand.u32 %v45, 4294901760
    %202 = vmatpush1.msra.mxu0 %v201
    %203 = vmatprep.subr.mxu0 0.0
    %v204 = vand.u32 %v46, 4294901760
    %205 = vmatpush1.msra.mxu0 %v204
    %206 = vmatprep.subr.mxu0 0.0
    %v207 = vand.u32 %v47, 4294901760
    %208 = vmatpush1.msra.mxu0 %v207
    %209 = vmatprep.subr.mxu0 0.0
    %v210 = vand.u32 %v48, 4294901760
    %211 = vmatpush1.msra.mxu0 %v210
    %212 = vmatprep.subr.mxu0 0.0
    %v213 = vand.u32 %v49, 4294901760
    %214 = vmatpush1.msra.mxu0 %v213
    %215 = vmatprep.subr.mxu0 0.0
    %v216 = vand.u32 %v50, 4294901760
    %217 = vmatpush1.msra.mxu0 %v216
    %218 = vmatprep.subr.mxu0 0.0
    %v219 = vand.u32 %v51, 4294901760
    %220 = vmatpush1.msra.mxu0 %v219
    %221 = vmatprep.subr.mxu0 0.0
    %v222 = vand.u32 %v52, 4294901760
    %223 = vmatpush1.msra.mxu0 %v222
    %224 = vmatprep.subr.mxu0 0.0
    %v225 = vand.u32 %v53, 4294901760
    %226 = vmatpush1.msra.mxu0 %v225
    %v227 = vand.u32 %v16, 4294901760
    %v228 = vsub.f32 %v16, %v227
    %v229 = vand.u32 %v228, 4294901760
    %v230 = vsub.f32 %v228, %v229
    %v231 = vand.u32 %v230, 4294901760
    %232 = vmatprep.mubr.f32.mxu0 %v231
    %v233 = vand.u32 %v15, 4294901760
    %v234 = vsub.f32 %v15, %v233
    %v235 = vand.u32 %v234, 4294901760
    %v236 = vsub.f32 %v234, %v235
    %v237 = vand.u32 %v236, 4294901760
    %238 = vmatmul.mubr.f32.gmra.mrb[0].mxu0 %v237
    %v239 = vpop.f32.mrb[0].mxu0
    %v240 = vadd.f32 %v125, %v239
    %v241 = vpop.f32.mrb[0].mxu0
    %242 = vdwg.mxu0
    %243 = vmatprep.subr.mxu0 0.0
    %v244 = vand.u32 %v22, 4294901760
    %v245 = vsub.f32 %v22, %v244
    %v246 = vand.u32 %v245, 4294901760
    %v247 = vsub.f32 %v245, %v246
    %v248 = vand.u32 %v247, 4294901760
    %249 = vmatpush1.msra.mxu0 %v248
    %250 = vmatprep.subr.mxu0 0.0
    %v251 = vand.u32 %v23, 4294901760
    %v252 = vsub.f32 %v23, %v251
    %v253 = vand.u32 %v252, 4294901760
    %v254 = vsub.f32 %v252, %v253
    %v255 = vand.u32 %v254, 4294901760
    %256 = vmatpush1.msra.mxu0 %v255
    %257 = vmatprep.subr.mxu0 0.0
    %v258 = vand.u32 %v24, 4294901760
    %v259 = vsub.f32 %v24, %v258
    %v260 = vand.u32 %v259, 4294901760
    %v261 = vsub.f32 %v259, %v260
    %v262 = vand.u32 %v261, 4294901760
    %263 = vmatpush1.msra.mxu0 %v262
    %264 = vmatprep.subr.mxu0 0.0
    %v265 = vand.u32 %v25, 4294901760
    %v266 = vsub.f32 %v25, %v265
    %v267 = vand.u32 %v266, 4294901760
    %v268 = vsub.f32 %v266, %v267
    %v269 = vand.u32 %v268, 4294901760
    %270 = vmatpush1.msra.mxu0 %v269
    %271 = vmatprep.subr.mxu0 0.0
    %v272 = vand.u32 %v26, 4294901760
    %v273 = vsub.f32 %v26, %v272
    %v274 = vand.u32 %v273, 4294901760
    %v275 = vsub.f32 %v273, %v274
    %v276 = vand.u32 %v275, 4294901760
    %277 = vmatpush1.msra.mxu0 %v276
    %278 = vmatprep.subr.mxu0 0.0
    %v279 = vand.u32 %v27, 4294901760
    %v280 = vsub.f32 %v27, %v279
    %v281 = vand.u32 %v280, 4294901760
    %v282 = vsub.f32 %v280, %v281
    %v283 = vand.u32 %v282, 4294901760
    %284 = vmatpush1.msra.mxu0 %v283
    %285 = vmatprep.subr.mxu0 0.0
    %v286 = vand.u32 %v28, 4294901760
    %v287 = vsub.f32 %v28, %v286
    %v288 = vand.u32 %v287, 4294901760
    %v289 = vsub.f32 %v287, %v288
    %v290 = vand.u32 %v289, 4294901760
    %291 = vmatpush1.msra.mxu0 %v290
    %292 = vmatprep.subr.mxu0 0.0
    %v293 = vand.u32 %v29, 4294901760
    %v294 = vsub.f32 %v29, %v293
    %v295 = vand.u32 %v294, 4294901760
    %v296 = vsub.f32 %v294, %v295
    %v297 = vand.u32 %v296, 4294901760
    %298 = vmatpush1.msra.mxu0 %v297
    %299 = vmatprep.subr.mxu0 0.0
    %v300 = vand.u32 %v30, 4294901760
    %v301 = vsub.f32 %v30, %v300
    %v302 = vand.u32 %v301, 4294901760
    %v303 = vsub.f32 %v301, %v302
    %v304 = vand.u32 %v303, 4294901760
    %305 = vmatpush1.msra.mxu0 %v304
    %306 = vmatprep.subr.mxu0 0.0
    %v307 = vand.u32 %v31, 4294901760
    %v308 = vsub.f32 %v31, %v307
    %v309 = vand.u32 %v308, 4294901760
    %v310 = vsub.f32 %v308, %v309
    %v311 = vand.u32 %v310, 4294901760
    %312 = vmatpush1.msra.mxu0 %v311
    %313 = vmatprep.subr.mxu0 0.0
    %v314 = vand.u32 %v32, 4294901760
    %v315 = vsub.f32 %v32, %v314
    %v316 = vand.u32 %v315, 4294901760
    %v317 = vsub.f32 %v315, %v316
    %v318 = vand.u32 %v317, 4294901760
    %319 = vmatpush1.msra.mxu0 %v318
    %320 = vmatprep.subr.mxu0 0.0
    %v321 = vand.u32 %v33, 4294901760
    %v322 = vsub.f32 %v33, %v321
    %v323 = vand.u32 %v322, 4294901760
    %v324 = vsub.f32 %v322, %v323
    %v325 = vand.u32 %v324, 4294901760
    %326 = vmatpush1.msra.mxu0 %v325
    %327 = vmatprep.subr.mxu0 0.0
    %v328 = vand.u32 %v34, 4294901760
    %v329 = vsub.f32 %v34, %v328
    %v330 = vand.u32 %v329, 4294901760
    %v331 = vsub.f32 %v329, %v330
    %v332 = vand.u32 %v331, 4294901760
    %333 = vmatpush1.msra.mxu0 %v332
    %334 = vmatprep.subr.mxu0 0.0
    %v335 = vand.u32 %v35, 4294901760
    %v336 = vsub.f32 %v35, %v335
    %v337 = vand.u32 %v336, 4294901760
    %v338 = vsub.f32 %v336, %v337
    %v339 = vand.u32 %v338, 4294901760
    %340 = vmatpush1.msra.mxu0 %v339
    %341 = vmatprep.subr.mxu0 0.0
    %v342 = vand.u32 %v36, 4294901760
    %v343 = vsub.f32 %v36, %v342
    %v344 = vand.u32 %v343, 4294901760
    %v345 = vsub.f32 %v343, %v344
    %v346 = vand.u32 %v345, 4294901760
    %347 = vmatpush1.msra.mxu0 %v346
    %348 = vmatprep.subr.mxu0 0.0
    %v349 = vand.u32 %v37, 4294901760
    %v350 = vsub.f32 %v37, %v349
    %v351 = vand.u32 %v350, 4294901760
    %v352 = vsub.f32 %v350, %v351
    %v353 = vand.u32 %v352, 4294901760
    %354 = vmatpush1.msra.mxu0 %v353
    %355 = vmatprep.subr.mxu0 0.0
    %v356 = vand.u32 %v38, 4294901760
    %v357 = vsub.f32 %v38, %v356
    %v358 = vand.u32 %v357, 4294901760
    %v359 = vsub.f32 %v357, %v358
    %v360 = vand.u32 %v359, 4294901760
    %361 = vmatpush1.msra.mxu0 %v360
    %362 = vmatprep.subr.mxu0 0.0
    %v363 = vand.u32 %v39, 4294901760
    %v364 = vsub.f32 %v39, %v363
    %v365 = vand.u32 %v364, 4294901760
    %v366 = vsub.f32 %v364, %v365
    %v367 = vand.u32 %v366, 4294901760
    %368 = vmatpush1.msra.mxu0 %v367
    %369 = vmatprep.subr.mxu0 0.0
    %v370 = vand.u32 %v40, 4294901760
    %v371 = vsub.f32 %v40, %v370
    %v372 = vand.u32 %v371, 4294901760
    %v373 = vsub.f32 %v371, %v372
    %v374 = vand.u32 %v373, 4294901760
    %375 = vmatpush1.msra.mxu0 %v374
    %376 = vmatprep.subr.mxu0 0.0
    %v377 = vand.u32 %v41, 4294901760
    %v378 = vsub.f32 %v41, %v377
    %v379 = vand.u32 %v378, 4294901760
    %v380 = vsub.f32 %v378, %v379
    %v381 = vand.u32 %v380, 4294901760
    %382 = vmatpush1.msra.mxu0 %v381
    %383 = vmatprep.subr.mxu0 0.0
    %v384 = vand.u32 %v42, 4294901760
    %v385 = vsub.f32 %v42, %v384
    %v386 = vand.u32 %v385, 4294901760
    %v387 = vsub.f32 %v385, %v386
    %v388 = vand.u32 %v387, 4294901760
    %389 = vmatpush1.msra.mxu0 %v388
    %390 = vmatprep.subr.mxu0 0.0
    %v391 = vand.u32 %v43, 4294901760
    %v392 = vsub.f32 %v43, %v391
    %v393 = vand.u32 %v392, 4294901760
    %v394 = vsub.f32 %v392, %v393
    %v395 = vand.u32 %v394, 4294901760
    %396 = vmatpush1.msra.mxu0 %v395
    %397 = vmatprep.subr.mxu0 0.0
    %v398 = vand.u32 %v44, 4294901760
    %v399 = vsub.f32 %v44, %v398
    %v400 = vand.u32 %v399, 4294901760
    %v401 = vsub.f32 %v399, %v400
    %v402 = vand.u32 %v401, 4294901760
    %403 = vmatpush1.msra.mxu0 %v402
    %404 = vmatprep.subr.mxu0 0.0
    %v405 = vand.u32 %v45, 4294901760
    %v406 = vsub.f32 %v45, %v405
    %v407 = vand.u32 %v406, 4294901760
    %v408 = vsub.f32 %v406, %v407
    %v409 = vand.u32 %v408, 4294901760
    %410 = vmatpush1.msra.mxu0 %v409
    %411 = vmatprep.subr.mxu0 0.0
    %v412 = vand.u32 %v46, 4294901760
    %v413 = vsub.f32 %v46, %v412
    %v414 = vand.u32 %v413, 4294901760
    %v415 = vsub.f32 %v413, %v414
    %v416 = vand.u32 %v415, 4294901760
    %417 = vmatpush1.msra.mxu0 %v416
    %418 = vmatprep.subr.mxu0 0.0
    %v419 = vand.u32 %v47, 4294901760
    %v420 = vsub.f32 %v47, %v419
    %v421 = vand.u32 %v420, 4294901760
    %v422 = vsub.f32 %v420, %v421
    %v423 = vand.u32 %v422, 4294901760
    %424 = vmatpush1.msra.mxu0 %v423
    %425 = vmatprep.subr.mxu0 0.0
    %v426 = vand.u32 %v48, 4294901760
    %v427 = vsub.f32 %v48, %v426
    %v428 = vand.u32 %v427, 4294901760
    %v429 = vsub.f32 %v427, %v428
    %v430 = vand.u32 %v429, 4294901760
    %431 = vmatpush1.msra.mxu0 %v430
    %432 = vmatprep.subr.mxu0 0.0
    %v433 = vand.u32 %v49, 4294901760
    %v434 = vsub.f32 %v49, %v433
    %v435 = vand.u32 %v434, 4294901760
    %v436 = vsub.f32 %v434, %v435
    %v437 = vand.u32 %v436, 4294901760
    %438 = vmatpush1.msra.mxu0 %v437
    %439 = vmatprep.subr.mxu0 0.0
    %v440 = vand.u32 %v50, 4294901760
    %v441 = vsub.f32 %v50, %v440
    %v442 = vand.u32 %v441, 4294901760
    %v443 = vsub.f32 %v441, %v442
    %v444 = vand.u32 %v443, 4294901760
    %445 = vmatpush1.msra.mxu0 %v444
    %446 = vmatprep.subr.mxu0 0.0
    %v447 = vand.u32 %v51, 4294901760
    %v448 = vsub.f32 %v51, %v447
    %v449 = vand.u32 %v448, 4294901760
    %v450 = vsub.f32 %v448, %v449
    %v451 = vand.u32 %v450, 4294901760
    %452 = vmatpush1.msra.mxu0 %v451
    %453 = vmatprep.subr.mxu0 0.0
    %v454 = vand.u32 %v52, 4294901760
    %v455 = vsub.f32 %v52, %v454
    %v456 = vand.u32 %v455, 4294901760
    %v457 = vsub.f32 %v455, %v456
    %v458 = vand.u32 %v457, 4294901760
    %459 = vmatpush1.msra.mxu0 %v458
    %460 = vmatprep.subr.mxu0 0.0
    %v461 = vand.u32 %v53, 4294901760
    %v462 = vsub.f32 %v53, %v461
    %v463 = vand.u32 %v462, 4294901760
    %v464 = vsub.f32 %v462, %v463
    %v465 = vand.u32 %v464, 4294901760
    %466 = vmatpush1.msra.mxu0 %v465
    %v467 = vand.u32 %v16, 4294901760
    %468 = vmatprep.mubr.f32.mxu0 %v467
    %v469 = vand.u32 %v15, 4294901760
    %470 = vmatmul.mubr.f32.gmra.mrb[0].mxu0 %v469
    %v471 = vpop.f32.mrb[0].mxu0
    %v472 = vadd.f32 %v240, %v471
    %v473 = vpop.f32.mrb[0].mxu0
    %474 = vdwg.mxu0
    %475 = vmatprep.subr.mxu0 0.0
    %v476 = vand.u32 %v22, 4294901760
    %v477 = vsub.f32 %v22, %v476
    %478 = vmatpush1.msra.mxu0 %v477
    %479 = vmatprep.subr.mxu0 0.0
    %v480 = vand.u32 %v23, 4294901760
    %v481 = vsub.f32 %v23, %v480
    %482 = vmatpush1.msra.mxu0 %v481
    %483 = vmatprep.subr.mxu0 0.0
    %v484 = vand.u32 %v24, 4294901760
    %v485 = vsub.f32 %v24, %v484
    %486 = vmatpush1.msra.mxu0 %v485
    %487 = vmatprep.subr.mxu0 0.0
    %v488 = vand.u32 %v25, 4294901760
    %v489 = vsub.f32 %v25, %v488
    %490 = vmatpush1.msra.mxu0 %v489
    %491 = vmatprep.subr.mxu0 0.0
    %v492 = vand.u32 %v26, 4294901760
    %v493 = vsub.f32 %v26, %v492
    %494 = vmatpush1.msra.mxu0 %v493
    %495 = vmatprep.subr.mxu0 0.0
    %v496 = vand.u32 %v27, 4294901760
    %v497 = vsub.f32 %v27, %v496
    %498 = vmatpush1.msra.mxu0 %v497
    %499 = vmatprep.subr.mxu0 0.0
    %v500 = vand.u32 %v28, 4294901760
    %v501 = vsub.f32 %v28, %v500
    %502 = vmatpush1.msra.mxu0 %v501
    %503 = vmatprep.subr.mxu0 0.0
    %v504 = vand.u32 %v29, 4294901760
    %v505 = vsub.f32 %v29, %v504
    %506 = vmatpush1.msra.mxu0 %v505
    %507 = vmatprep.subr.mxu0 0.0
    %v508 = vand.u32 %v30, 4294901760
    %v509 = vsub.f32 %v30, %v508
    %510 = vmatpush1.msra.mxu0 %v509
    %511 = vmatprep.subr.mxu0 0.0
    %v512 = vand.u32 %v31, 4294901760
    %v513 = vsub.f32 %v31, %v512
    %514 = vmatpush1.msra.mxu0 %v513
    %515 = vmatprep.subr.mxu0 0.0
    %v516 = vand.u32 %v32, 4294901760
    %v517 = vsub.f32 %v32, %v516
    %518 = vmatpush1.msra.mxu0 %v517
    %519 = vmatprep.subr.mxu0 0.0
    %v520 = vand.u32 %v33, 4294901760
    %v521 = vsub.f32 %v33, %v520
    %522 = vmatpush1.msra.mxu0 %v521
    %523 = vmatprep.subr.mxu0 0.0
    %v524 = vand.u32 %v34, 4294901760
    %v525 = vsub.f32 %v34, %v524
    %526 = vmatpush1.msra.mxu0 %v525
    %527 = vmatprep.subr.mxu0 0.0
    %v528 = vand.u32 %v35, 4294901760
    %v529 = vsub.f32 %v35, %v528
    %530 = vmatpush1.msra.mxu0 %v529
    %531 = vmatprep.subr.mxu0 0.0
    %v532 = vand.u32 %v36, 4294901760
    %v533 = vsub.f32 %v36, %v532
    %534 = vmatpush1.msra.mxu0 %v533
    %535 = vmatprep.subr.mxu0 0.0
    %v536 = vand.u32 %v37, 4294901760
    %v537 = vsub.f32 %v37, %v536
    %538 = vmatpush1.msra.mxu0 %v537
    %539 = vmatprep.subr.mxu0 0.0
    %v540 = vand.u32 %v38, 4294901760
    %v541 = vsub.f32 %v38, %v540
    %542 = vmatpush1.msra.mxu0 %v541
    %543 = vmatprep.subr.mxu0 0.0
    %v544 = vand.u32 %v39, 4294901760
    %v545 = vsub.f32 %v39, %v544
    %546 = vmatpush1.msra.mxu0 %v545
    %547 = vmatprep.subr.mxu0 0.0
    %v548 = vand.u32 %v40, 4294901760
    %v549 = vsub.f32 %v40, %v548
    %550 = vmatpush1.msra.mxu0 %v549
    %551 = vmatprep.subr.mxu0 0.0
    %v552 = vand.u32 %v41, 4294901760
    %v553 = vsub.f32 %v41, %v552
    %554 = vmatpush1.msra.mxu0 %v553
    %555 = vmatprep.subr.mxu0 0.0
    %v556 = vand.u32 %v42, 4294901760
    %v557 = vsub.f32 %v42, %v556
    %558 = vmatpush1.msra.mxu0 %v557
    %559 = vmatprep.subr.mxu0 0.0
    %v560 = vand.u32 %v43, 4294901760
    %v561 = vsub.f32 %v43, %v560
    %562 = vmatpush1.msra.mxu0 %v561
    %563 = vmatprep.subr.mxu0 0.0
    %v564 = vand.u32 %v44, 4294901760
    %v565 = vsub.f32 %v44, %v564
    %566 = vmatpush1.msra.mxu0 %v565
    %567 = vmatprep.subr.mxu0 0.0
    %v568 = vand.u32 %v45, 4294901760
    %v569 = vsub.f32 %v45, %v568
    %570 = vmatpush1.msra.mxu0 %v569
    %571 = vmatprep.subr.mxu0 0.0
    %v572 = vand.u32 %v46, 4294901760
    %v573 = vsub.f32 %v46, %v572
    %574 = vmatpush1.msra.mxu0 %v573
    %575 = vmatprep.subr.mxu0 0.0
    %v576 = vand.u32 %v47, 4294901760
    %v577 = vsub.f32 %v47, %v576
    %578 = vmatpush1.msra.mxu0 %v577
    %579 = vmatprep.subr.mxu0 0.0
    %v580 = vand.u32 %v48, 4294901760
    %v581 = vsub.f32 %v48, %v580
    %582 = vmatpush1.msra.mxu0 %v581
    %583 = vmatprep.subr.mxu0 0.0
    %v584 = vand.u32 %v49, 4294901760
    %v585 = vsub.f32 %v49, %v584
    %586 = vmatpush1.msra.mxu0 %v585
    %587 = vmatprep.subr.mxu0 0.0
    %v588 = vand.u32 %v50, 4294901760
    %v589 = vsub.f32 %v50, %v588
    %590 = vmatpush1.msra.mxu0 %v589
    %591 = vmatprep.subr.mxu0 0.0
    %v592 = vand.u32 %v51, 4294901760
    %v593 = vsub.f32 %v51, %v592
    %594 = vmatpush1.msra.mxu0 %v593
    %595 = vmatprep.subr.mxu0 0.0
    %v596 = vand.u32 %v52, 4294901760
    %v597 = vsub.f32 %v52, %v596
    %598 = vmatpush1.msra.mxu0 %v597
    %599 = vmatprep.subr.mxu0 0.0
    %v600 = vand.u32 %v53, 4294901760
    %v601 = vsub.f32 %v53, %v600
    %602 = vmatpush1.msra.mxu0 %v601
    %v603 = vand.u32 %v16, 4294901760
    %v604 = vsub.f32 %v16, %v603
    %605 = vmatprep.mubr.f32.mxu0 %v604
    %v606 = vand.u32 %v15, 4294901760
    %v607 = vsub.f32 %v15, %v606
    %608 = vmatmul.mubr.f32.gmra.mrb[0].mxu0 %v607
    %v609 = vpop.f32.mrb[0].mxu0
    %v610 = vadd.f32 %v472, %v609
    %v611 = vpop.f32.mrb[0].mxu0
    %612 = vdwg.mxu0
    %613 = vmatprep.subr.mxu0 0.0
    %v614 = vand.u32 %v22, 4294901760
    %615 = vmatpush1.msra.mxu0 %v614
    %616 = vmatprep.subr.mxu0 0.0
    %v617 = vand.u32 %v23, 4294901760
    %618 = vmatpush1.msra.mxu0 %v617
    %619 = vmatprep.subr.mxu0 0.0
    %v620 = vand.u32 %v24, 4294901760
    %621 = vmatpush1.msra.mxu0 %v620
    %622 = vmatprep.subr.mxu0 0.0
    %v623 = vand.u32 %v25, 4294901760
    %624 = vmatpush1.msra.mxu0 %v623
    %625 = vmatprep.subr.mxu0 0.0
    %v626 = vand.u32 %v26, 4294901760
    %627 = vmatpush1.msra.mxu0 %v626
    %628 = vmatprep.subr.mxu0 0.0
    %v629 = vand.u32 %v27, 4294901760
    %630 = vmatpush1.msra.mxu0 %v629
    %631 = vmatprep.subr.mxu0 0.0
    %v632 = vand.u32 %v28, 4294901760
    %633 = vmatpush1.msra.mxu0 %v632
    %634 = vmatprep.subr.mxu0 0.0
    %v635 = vand.u32 %v29, 4294901760
    %636 = vmatpush1.msra.mxu0 %v635
    %637 = vmatprep.subr.mxu0 0.0
    %v638 = vand.u32 %v30, 4294901760
    %639 = vmatpush1.msra.mxu0 %v638
    %640 = vmatprep.subr.mxu0 0.0
    %v641 = vand.u32 %v31, 4294901760
    %642 = vmatpush1.msra.mxu0 %v641
    %643 = vmatprep.subr.mxu0 0.0
    %v644 = vand.u32 %v32, 4294901760
    %645 = vmatpush1.msra.mxu0 %v644
    %646 = vmatprep.subr.mxu0 0.0
    %v647 = vand.u32 %v33, 4294901760
    %648 = vmatpush1.msra.mxu0 %v647
    %649 = vmatprep.subr.mxu0 0.0
    %v650 = vand.u32 %v34, 4294901760
    %651 = vmatpush1.msra.mxu0 %v650
    %652 = vmatprep.subr.mxu0 0.0
    %v653 = vand.u32 %v35, 4294901760
    %654 = vmatpush1.msra.mxu0 %v653
    %655 = vmatprep.subr.mxu0 0.0
    %v656 = vand.u32 %v36, 4294901760
    %657 = vmatpush1.msra.mxu0 %v656
    %658 = vmatprep.subr.mxu0 0.0
    %v659 = vand.u32 %v37, 4294901760
    %660 = vmatpush1.msra.mxu0 %v659
    %661 = vmatprep.subr.mxu0 0.0
    %v662 = vand.u32 %v38, 4294901760
    %663 = vmatpush1.msra.mxu0 %v662
    %664 = vmatprep.subr.mxu0 0.0
    %v665 = vand.u32 %v39, 4294901760
    %666 = vmatpush1.msra.mxu0 %v665
    %667 = vmatprep.subr.mxu0 0.0
    %v668 = vand.u32 %v40, 4294901760
    %669 = vmatpush1.msra.mxu0 %v668
    %670 = vmatprep.subr.mxu0 0.0
    %v671 = vand.u32 %v41, 4294901760
    %672 = vmatpush1.msra.mxu0 %v671
    %673 = vmatprep.subr.mxu0 0.0
    %v674 = vand.u32 %v42, 4294901760
    %675 = vmatpush1.msra.mxu0 %v674
    %676 = vmatprep.subr.mxu0 0.0
    %v677 = vand.u32 %v43, 4294901760
    %678 = vmatpush1.msra.mxu0 %v677
    %679 = vmatprep.subr.mxu0 0.0
    %v680 = vand.u32 %v44, 4294901760
    %681 = vmatpush1.msra.mxu0 %v680
    %682 = vmatprep.subr.mxu0 0.0
    %v683 = vand.u32 %v45, 4294901760
    %684 = vmatpush1.msra.mxu0 %v683
    %685 = vmatprep.subr.mxu0 0.0
    %v686 = vand.u32 %v46, 4294901760
    %687 = vmatpush1.msra.mxu0 %v686
    %688 = vmatprep.subr.mxu0 0.0
    %v689 = vand.u32 %v47, 4294901760
    %690 = vmatpush1.msra.mxu0 %v689
    %691 = vmatprep.subr.mxu0 0.0
    %v692 = vand.u32 %v48, 4294901760
    %693 = vmatpush1.msra.mxu0 %v692
    %694 = vmatprep.subr.mxu0 0.0
    %v695 = vand.u32 %v49, 4294901760
    %696 = vmatpush1.msra.mxu0 %v695
    %697 = vmatprep.subr.mxu0 0.0
    %v698 = vand.u32 %v50, 4294901760
    %699 = vmatpush1.msra.mxu0 %v698
    %700 = vmatprep.subr.mxu0 0.0
    %v701 = vand.u32 %v51, 4294901760
    %702 = vmatpush1.msra.mxu0 %v701
    %703 = vmatprep.subr.mxu0 0.0
    %v704 = vand.u32 %v52, 4294901760
    %705 = vmatpush1.msra.mxu0 %v704
    %706 = vmatprep.subr.mxu0 0.0
    %v707 = vand.u32 %v53, 4294901760
    %708 = vmatpush1.msra.mxu0 %v707
    %v709 = vand.u32 %v16, 4294901760
    %v710 = vsub.f32 %v16, %v709
    %v711 = vand.u32 %v710, 4294901760
    %712 = vmatprep.mubr.f32.mxu0 %v711
    %v713 = vand.u32 %v15, 4294901760
    %v714 = vsub.f32 %v15, %v713
    %v715 = vand.u32 %v714, 4294901760
    %716 = vmatmul.mubr.f32.gmra.mrb[0].mxu0 %v715
    %v717 = vpop.f32.mrb[0].mxu0
    %v718 = vadd.f32 %v610, %v717
    %v719 = vpop.f32.mrb[0].mxu0
    %720 = vdwg.mxu0
    %721 = vmatprep.subr.mxu0 0.0
    %v722 = vand.u32 %v22, 4294901760
    %v723 = vsub.f32 %v22, %v722
    %v724 = vand.u32 %v723, 4294901760
    %725 = vmatpush1.msra.mxu0 %v724
    %726 = vmatprep.subr.mxu0 0.0
    %v727 = vand.u32 %v23, 4294901760
    %v728 = vsub.f32 %v23, %v727
    %v729 = vand.u32 %v728, 4294901760
    %730 = vmatpush1.msra.mxu0 %v729
    %731 = vmatprep.subr.mxu0 0.0
    %v732 = vand.u32 %v24, 4294901760
    %v733 = vsub.f32 %v24, %v732
    %v734 = vand.u32 %v733, 4294901760
    %735 = vmatpush1.msra.mxu0 %v734
    %736 = vmatprep.subr.mxu0 0.0
    %v737 = vand.u32 %v25, 4294901760
    %v738 = vsub.f32 %v25, %v737
    %v739 = vand.u32 %v738, 4294901760
    %740 = vmatpush1.msra.mxu0 %v739
    %741 = vmatprep.subr.mxu0 0.0
    %v742 = vand.u32 %v26, 4294901760
    %v743 = vsub.f32 %v26, %v742
    %v744 = vand.u32 %v743, 4294901760
    %745 = vmatpush1.msra.mxu0 %v744
    %746 = vmatprep.subr.mxu0 0.0
    %v747 = vand.u32 %v27, 4294901760
    %v748 = vsub.f32 %v27, %v747
    %v749 = vand.u32 %v748, 4294901760
    %750 = vmatpush1.msra.mxu0 %v749
    %751 = vmatprep.subr.mxu0 0.0
    %v752 = vand.u32 %v28, 4294901760
    %v753 = vsub.f32 %v28, %v752
    %v754 = vand.u32 %v753, 4294901760
    %755 = vmatpush1.msra.mxu0 %v754
    %756 = vmatprep.subr.mxu0 0.0
    %v757 = vand.u32 %v29, 4294901760
    %v758 = vsub.f32 %v29, %v757
    %v759 = vand.u32 %v758, 4294901760
    %760 = vmatpush1.msra.mxu0 %v759
    %761 = vmatprep.subr.mxu0 0.0
    %v762 = vand.u32 %v30, 4294901760
    %v763 = vsub.f32 %v30, %v762
    %v764 = vand.u32 %v763, 4294901760
    %765 = vmatpush1.msra.mxu0 %v764
    %766 = vmatprep.subr.mxu0 0.0
    %v767 = vand.u32 %v31, 4294901760
    %v768 = vsub.f32 %v31, %v767
    %v769 = vand.u32 %v768, 4294901760
    %770 = vmatpush1.msra.mxu0 %v769
    %771 = vmatprep.subr.mxu0 0.0
    %v772 = vand.u32 %v32, 4294901760
    %v773 = vsub.f32 %v32, %v772
    %v774 = vand.u32 %v773, 4294901760
    %775 = vmatpush1.msra.mxu0 %v774
    %776 = vmatprep.subr.mxu0 0.0
    %v777 = vand.u32 %v33, 4294901760
    %v778 = vsub.f32 %v33, %v777
    %v779 = vand.u32 %v778, 4294901760
    %780 = vmatpush1.msra.mxu0 %v779
    %781 = vmatprep.subr.mxu0 0.0
    %v782 = vand.u32 %v34, 4294901760
    %v783 = vsub.f32 %v34, %v782
    %v784 = vand.u32 %v783, 4294901760
    %785 = vmatpush1.msra.mxu0 %v784
    %786 = vmatprep.subr.mxu0 0.0
    %v787 = vand.u32 %v35, 4294901760
    %v788 = vsub.f32 %v35, %v787
    %v789 = vand.u32 %v788, 4294901760
    %790 = vmatpush1.msra.mxu0 %v789
    %791 = vmatprep.subr.mxu0 0.0
    %v792 = vand.u32 %v36, 4294901760
    %v793 = vsub.f32 %v36, %v792
    %v794 = vand.u32 %v793, 4294901760
    %795 = vmatpush1.msra.mxu0 %v794
    %796 = vmatprep.subr.mxu0 0.0
    %v797 = vand.u32 %v37, 4294901760
    %v798 = vsub.f32 %v37, %v797
    %v799 = vand.u32 %v798, 4294901760
    %800 = vmatpush1.msra.mxu0 %v799
    %801 = vmatprep.subr.mxu0 0.0
    %v802 = vand.u32 %v38, 4294901760
    %v803 = vsub.f32 %v38, %v802
    %v804 = vand.u32 %v803, 4294901760
    %805 = vmatpush1.msra.mxu0 %v804
    %806 = vmatprep.subr.mxu0 0.0
    %v807 = vand.u32 %v39, 4294901760
    %v808 = vsub.f32 %v39, %v807
    %v809 = vand.u32 %v808, 4294901760
    %810 = vmatpush1.msra.mxu0 %v809
    %811 = vmatprep.subr.mxu0 0.0
    %v812 = vand.u32 %v40, 4294901760
    %v813 = vsub.f32 %v40, %v812
    %v814 = vand.u32 %v813, 4294901760
    %815 = vmatpush1.msra.mxu0 %v814
    %816 = vmatprep.subr.mxu0 0.0
    %v817 = vand.u32 %v41, 4294901760
    %v818 = vsub.f32 %v41, %v817
    %v819 = vand.u32 %v818, 4294901760
    %820 = vmatpush1.msra.mxu0 %v819
    %821 = vmatprep.subr.mxu0 0.0
    %v822 = vand.u32 %v42, 4294901760
    %v823 = vsub.f32 %v42, %v822
    %v824 = vand.u32 %v823, 4294901760
    %825 = vmatpush1.msra.mxu0 %v824
    %826 = vmatprep.subr.mxu0 0.0
    %v827 = vand.u32 %v43, 4294901760
    %v828 = vsub.f32 %v43, %v827
    %v829 = vand.u32 %v828, 4294901760
    %830 = vmatpush1.msra.mxu0 %v829
    %831 = vmatprep.subr.mxu0 0.0
    %v832 = vand.u32 %v44, 4294901760
    %v833 = vsub.f32 %v44, %v832
    %v834 = vand.u32 %v833, 4294901760
    %835 = vmatpush1.msra.mxu0 %v834
    %836 = vmatprep.subr.mxu0 0.0
    %v837 = vand.u32 %v45, 4294901760
    %v838 = vsub.f32 %v45, %v837
    %v839 = vand.u32 %v838, 4294901760
    %840 = vmatpush1.msra.mxu0 %v839
    %841 = vmatprep.subr.mxu0 0.0
    %v842 = vand.u32 %v46, 4294901760
    %v843 = vsub.f32 %v46, %v842
    %v844 = vand.u32 %v843, 4294901760
    %845 = vmatpush1.msra.mxu0 %v844
    %846 = vmatprep.subr.mxu0 0.0
    %v847 = vand.u32 %v47, 4294901760
    %v848 = vsub.f32 %v47, %v847
    %v849 = vand.u32 %v848, 4294901760
    %850 = vmatpush1.msra.mxu0 %v849
    %851 = vmatprep.subr.mxu0 0.0
    %v852 = vand.u32 %v48, 4294901760
    %v853 = vsub.f32 %v48, %v852
    %v854 = vand.u32 %v853, 4294901760
    %855 = vmatpush1.msra.mxu0 %v854
    %856 = vmatprep.subr.mxu0 0.0
    %v857 = vand.u32 %v49, 4294901760
    %v858 = vsub.f32 %v49, %v857
    %v859 = vand.u32 %v858, 4294901760
    %860 = vmatpush1.msra.mxu0 %v859
    %861 = vmatprep.subr.mxu0 0.0
    %v862 = vand.u32 %v50, 4294901760
    %v863 = vsub.f32 %v50, %v862
    %v864 = vand.u32 %v863, 4294901760
    %865 = vmatpush1.msra.mxu0 %v864
    %866 = vmatprep.subr.mxu0 0.0
    %v867 = vand.u32 %v51, 4294901760
    %v868 = vsub.f32 %v51, %v867
    %v869 = vand.u32 %v868, 4294901760
    %870 = vmatpush1.msra.mxu0 %v869
    %871 = vmatprep.subr.mxu0 0.0
    %v872 = vand.u32 %v52, 4294901760
    %v873 = vsub.f32 %v52, %v872
    %v874 = vand.u32 %v873, 4294901760
    %875 = vmatpush1.msra.mxu0 %v874
    %876 = vmatprep.subr.mxu0 0.0
    %v877 = vand.u32 %v53, 4294901760
    %v878 = vsub.f32 %v53, %v877
    %v879 = vand.u32 %v878, 4294901760
    %880 = vmatpush1.msra.mxu0 %v879
    %v881 = vand.u32 %v16, 4294901760
    %882 = vmatprep.mubr.f32.mxu0 %v881
    %v883 = vand.u32 %v15, 4294901760
    %884 = vmatmul.mubr.f32.gmra.mrb[0].mxu0 %v883
    %v885 = vpop.f32.mrb[0].mxu0
    %v886 = vadd.f32 %v718, %v885
    %v887 = vpop.f32.mrb[0].mxu0
    %888 = vdwg.mxu0
    %889 = vmatprep.subr.mxu0 0.0
    %v890 = vand.u32 %v22, 4294901760
    %891 = vmatpush1.msra.mxu0 %v890
    %892 = vmatprep.subr.mxu0 0.0
    %v893 = vand.u32 %v23, 4294901760
    %894 = vmatpush1.msra.mxu0 %v893
    %895 = vmatprep.subr.mxu0 0.0
    %v896 = vand.u32 %v24, 4294901760
    %897 = vmatpush1.msra.mxu0 %v896
    %898 = vmatprep.subr.mxu0 0.0
    %v899 = vand.u32 %v25, 4294901760
    %900 = vmatpush1.msra.mxu0 %v899
    %901 = vmatprep.subr.mxu0 0.0
    %v902 = vand.u32 %v26, 4294901760
    %903 = vmatpush1.msra.mxu0 %v902
    %904 = vmatprep.subr.mxu0 0.0
    %v905 = vand.u32 %v27, 4294901760
    %906 = vmatpush1.msra.mxu0 %v905
    %907 = vmatprep.subr.mxu0 0.0
    %v908 = vand.u32 %v28, 4294901760
    %909 = vmatpush1.msra.mxu0 %v908
    %910 = vmatprep.subr.mxu0 0.0
    %v911 = vand.u32 %v29, 4294901760
    %912 = vmatpush1.msra.mxu0 %v911
    %913 = vmatprep.subr.mxu0 0.0
    %v914 = vand.u32 %v30, 4294901760
    %915 = vmatpush1.msra.mxu0 %v914
    %916 = vmatprep.subr.mxu0 0.0
    %v917 = vand.u32 %v31, 4294901760
    %918 = vmatpush1.msra.mxu0 %v917
    %919 = vmatprep.subr.mxu0 0.0
    %v920 = vand.u32 %v32, 4294901760
    %921 = vmatpush1.msra.mxu0 %v920
    %922 = vmatprep.subr.mxu0 0.0
    %v923 = vand.u32 %v33, 4294901760
    %924 = vmatpush1.msra.mxu0 %v923
    %925 = vmatprep.subr.mxu0 0.0
    %v926 = vand.u32 %v34, 4294901760
    %927 = vmatpush1.msra.mxu0 %v926
    %928 = vmatprep.subr.mxu0 0.0
    %v929 = vand.u32 %v35, 4294901760
    %930 = vmatpush1.msra.mxu0 %v929
    %931 = vmatprep.subr.mxu0 0.0
    %v932 = vand.u32 %v36, 4294901760
    %933 = vmatpush1.msra.mxu0 %v932
    %934 = vmatprep.subr.mxu0 0.0
    %v935 = vand.u32 %v37, 4294901760
    %936 = vmatpush1.msra.mxu0 %v935
    %937 = vmatprep.subr.mxu0 0.0
    %v938 = vand.u32 %v38, 4294901760
    %939 = vmatpush1.msra.mxu0 %v938
    %940 = vmatprep.subr.mxu0 0.0
    %v941 = vand.u32 %v39, 4294901760
    %942 = vmatpush1.msra.mxu0 %v941
    %943 = vmatprep.subr.mxu0 0.0
    %v944 = vand.u32 %v40, 4294901760
    %945 = vmatpush1.msra.mxu0 %v944
    %946 = vmatprep.subr.mxu0 0.0
    %v947 = vand.u32 %v41, 4294901760
    %948 = vmatpush1.msra.mxu0 %v947
    %949 = vmatprep.subr.mxu0 0.0
    %v950 = vand.u32 %v42, 4294901760
    %951 = vmatpush1.msra.mxu0 %v950
    %952 = vmatprep.subr.mxu0 0.0
    %v953 = vand.u32 %v43, 4294901760
    %954 = vmatpush1.msra.mxu0 %v953
    %955 = vmatprep.subr.mxu0 0.0
    %v956 = vand.u32 %v44, 4294901760
    %957 = vmatpush1.msra.mxu0 %v956
    %958 = vmatprep.subr.mxu0 0.0
    %v959 = vand.u32 %v45, 4294901760
    %960 = vmatpush1.msra.mxu0 %v959
    %961 = vmatprep.subr.mxu0 0.0
    %v962 = vand.u32 %v46, 4294901760
    %963 = vmatpush1.msra.mxu0 %v962
    %964 = vmatprep.subr.mxu0 0.0
    %v965 = vand.u32 %v47, 4294901760
    %966 = vmatpush1.msra.mxu0 %v965
    %967 = vmatprep.subr.mxu0 0.0
    %v968 = vand.u32 %v48, 4294901760
    %969 = vmatpush1.msra.mxu0 %v968
    %970 = vmatprep.subr.mxu0 0.0
    %v971 = vand.u32 %v49, 4294901760
    %972 = vmatpush1.msra.mxu0 %v971
    %973 = vmatprep.subr.mxu0 0.0
    %v974 = vand.u32 %v50, 4294901760
    %975 = vmatpush1.msra.mxu0 %v974
    %976 = vmatprep.subr.mxu0 0.0
    %v977 = vand.u32 %v51, 4294901760
    %978 = vmatpush1.msra.mxu0 %v977
    %979 = vmatprep.subr.mxu0 0.0
    %v980 = vand.u32 %v52, 4294901760
    %981 = vmatpush1.msra.mxu0 %v980
    %982 = vmatprep.subr.mxu0 0.0
    %v983 = vand.u32 %v53, 4294901760
    %984 = vmatpush1.msra.mxu0 %v983
    %v985 = vand.u32 %v16, 4294901760
    %986 = vmatprep.mubr.f32.mxu0 %v985
    %v987 = vand.u32 %v15, 4294901760
    %988 = vmatmul.mubr.f32.gmra.mrb[0].mxu0 %v987
    %v989 = vpop.f32.mrb[0].mxu0
    %v990 = vadd.f32 %v886, %v989
    %v991 = vpop.f32.mrb[0].mxu0
    %992 = vdwg.mxu0
    %993 = vmatprep.subr.mxu0 0.0
    %v994 = vand.u32 %v54, 4294901760
    %995 = vmatpush1.msra.mxu0 %v994
    %996 = vmatprep.subr.mxu0 0.0
    %v997 = vand.u32 %v55, 4294901760
    %998 = vmatpush1.msra.mxu0 %v997
    %999 = vmatprep.subr.mxu0 0.0
    %v1000 = vand.u32 %v56, 4294901760
    %1001 = vmatpush1.msra.mxu0 %v1000
    %1002 = vmatprep.subr.mxu0 0.0
    %v1003 = vand.u32 %v57, 4294901760
    %1004 = vmatpush1.msra.mxu0 %v1003
    %1005 = vmatprep.subr.mxu0 0.0
    %v1006 = vand.u32 %v58, 4294901760
    %1007 = vmatpush1.msra.mxu0 %v1006
    %1008 = vmatprep.subr.mxu0 0.0
    %v1009 = vand.u32 %v59, 4294901760
    %1010 = vmatpush1.msra.mxu0 %v1009
    %1011 = vmatprep.subr.mxu0 0.0
    %v1012 = vand.u32 %v60, 4294901760
    %1013 = vmatpush1.msra.mxu0 %v1012
    %1014 = vmatprep.subr.mxu0 0.0
    %v1015 = vand.u32 %v61, 4294901760
    %1016 = vmatpush1.msra.mxu0 %v1015
    %1017 = vmatprep.subr.mxu0 0.0
    %v1018 = vand.u32 %v62, 4294901760
    %1019 = vmatpush1.msra.mxu0 %v1018
    %1020 = vmatprep.subr.mxu0 0.0
    %v1021 = vand.u32 %v63, 4294901760
    %1022 = vmatpush1.msra.mxu0 %v1021
    %1023 = vmatprep.subr.mxu0 0.0
    %v1024 = vand.u32 %v64, 4294901760
    %1025 = vmatpush1.msra.mxu0 %v1024
    %1026 = vmatprep.subr.mxu0 0.0
    %v1027 = vand.u32 %v65, 4294901760
    %1028 = vmatpush1.msra.mxu0 %v1027
    %1029 = vmatprep.subr.mxu0 0.0
    %v1030 = vand.u32 %v66, 4294901760
    %1031 = vmatpush1.msra.mxu0 %v1030
    %1032 = vmatprep.subr.mxu0 0.0
    %v1033 = vand.u32 %v67, 4294901760
    %1034 = vmatpush1.msra.mxu0 %v1033
    %1035 = vmatprep.subr.mxu0 0.0
    %v1036 = vand.u32 %v68, 4294901760
    %1037 = vmatpush1.msra.mxu0 %v1036
    %1038 = vmatprep.subr.mxu0 0.0
    %v1039 = vand.u32 %v69, 4294901760
    %1040 = vmatpush1.msra.mxu0 %v1039
    %1041 = vmatprep.subr.mxu0 0.0
    %v1042 = vand.u32 %v70, 4294901760
    %1043 = vmatpush1.msra.mxu0 %v1042
    %1044 = vmatprep.subr.mxu0 0.0
    %v1045 = vand.u32 %v71, 4294901760
    %1046 = vmatpush1.msra.mxu0 %v1045
    %1047 = vmatprep.subr.mxu0 0.0
    %v1048 = vand.u32 %v72, 4294901760
    %1049 = vmatpush1.msra.mxu0 %v1048
    %1050 = vmatprep.subr.mxu0 0.0
    %v1051 = vand.u32 %v73, 4294901760
    %1052 = vmatpush1.msra.mxu0 %v1051
    %1053 = vmatprep.subr.mxu0 0.0
    %v1054 = vand.u32 %v74, 4294901760
    %1055 = vmatpush1.msra.mxu0 %v1054
    %1056 = vmatprep.subr.mxu0 0.0
    %v1057 = vand.u32 %v75, 4294901760
    %1058 = vmatpush1.msra.mxu0 %v1057
    %1059 = vmatprep.subr.mxu0 0.0
    %v1060 = vand.u32 %v76, 4294901760
    %1061 = vmatpush1.msra.mxu0 %v1060
    %1062 = vmatprep.subr.mxu0 0.0
    %v1063 = vand.u32 %v77, 4294901760
    %1064 = vmatpush1.msra.mxu0 %v1063
    %1065 = vmatprep.subr.mxu0 0.0
    %v1066 = vand.u32 %v78, 4294901760
    %1067 = vmatpush1.msra.mxu0 %v1066
    %1068 = vmatprep.subr.mxu0 0.0
    %v1069 = vand.u32 %v79, 4294901760
    %1070 = vmatpush1.msra.mxu0 %v1069
    %1071 = vmatprep.subr.mxu0 0.0
    %v1072 = vand.u32 %v80, 4294901760
    %1073 = vmatpush1.msra.mxu0 %v1072
    %1074 = vmatprep.subr.mxu0 0.0
    %v1075 = vand.u32 %v81, 4294901760
    %1076 = vmatpush1.msra.mxu0 %v1075
    %1077 = vmatprep.subr.mxu0 0.0
    %v1078 = vand.u32 %v82, 4294901760
    %1079 = vmatpush1.msra.mxu0 %v1078
    %1080 = vmatprep.subr.mxu0 0.0
    %v1081 = vand.u32 %v83, 4294901760
    %1082 = vmatpush1.msra.mxu0 %v1081
    %1083 = vmatprep.subr.mxu0 0.0
    %v1084 = vand.u32 %v84, 4294901760
    %1085 = vmatpush1.msra.mxu0 %v1084
    %1086 = vmatprep.subr.mxu0 0.0
    %v1087 = vand.u32 %v85, 4294901760
    %1088 = vmatpush1.msra.mxu0 %v1087
    %v1089 = vand.u32 %v18, 4294901760
    %v1090 = vsub.f32 %v18, %v1089
    %v1091 = vand.u32 %v1090, 4294901760
    %v1092 = vsub.f32 %v1090, %v1091
    %v1093 = vand.u32 %v1092, 4294901760
    %1094 = vmatprep.mubr.f32.mxu0 %v1093
    %v1095 = vand.u32 %v17, 4294901760
    %v1096 = vsub.f32 %v17, %v1095
    %v1097 = vand.u32 %v1096, 4294901760
    %v1098 = vsub.f32 %v1096, %v1097
    %v1099 = vand.u32 %v1098, 4294901760
    %1100 = vmatmul.mubr.f32.gmra.mrb[0].mxu0 %v1099
    %v1101 = vpop.f32.mrb[0].mxu0
    %v1102 = vadd.f32 %v990, %v1101
    %v1103 = vpop.f32.mrb[0].mxu0
    %1104 = vdwg.mxu0
    %1105 = vmatprep.subr.mxu0 0.0
    %v1106 = vand.u32 %v54, 4294901760
    %v1107 = vsub.f32 %v54, %v1106
    %v1108 = vand.u32 %v1107, 4294901760
    %v1109 = vsub.f32 %v1107, %v1108
    %v1110 = vand.u32 %v1109, 4294901760
    %1111 = vmatpush1.msra.mxu0 %v1110
    %1112 = vmatprep.subr.mxu0 0.0
    %v1113 = vand.u32 %v55, 4294901760
    %v1114 = vsub.f32 %v55, %v1113
    %v1115 = vand.u32 %v1114, 4294901760
    %v1116 = vsub.f32 %v1114, %v1115
    %v1117 = vand.u32 %v1116, 4294901760
    %1118 = vmatpush1.msra.mxu0 %v1117
    %1119 = vmatprep.subr.mxu0 0.0
    %v1120 = vand.u32 %v56, 4294901760
    %v1121 = vsub.f32 %v56, %v1120
    %v1122 = vand.u32 %v1121, 4294901760
    %v1123 = vsub.f32 %v1121, %v1122
    %v1124 = vand.u32 %v1123, 4294901760
    %1125 = vmatpush1.msra.mxu0 %v1124
    %1126 = vmatprep.subr.mxu0 0.0
    %v1127 = vand.u32 %v57, 4294901760
    %v1128 = vsub.f32 %v57, %v1127
    %v1129 = vand.u32 %v1128, 4294901760
    %v1130 = vsub.f32 %v1128, %v1129
    %v1131 = vand.u32 %v1130, 4294901760
    %1132 = vmatpush1.msra.mxu0 %v1131
    %1133 = vmatprep.subr.mxu0 0.0
    %v1134 = vand.u32 %v58, 4294901760
    %v1135 = vsub.f32 %v58, %v1134
    %v1136 = vand.u32 %v1135, 4294901760
    %v1137 = vsub.f32 %v1135, %v1136
    %v1138 = vand.u32 %v1137, 4294901760
    %1139 = vmatpush1.msra.mxu0 %v1138
    %1140 = vmatprep.subr.mxu0 0.0
    %v1141 = vand.u32 %v59, 4294901760
    %v1142 = vsub.f32 %v59, %v1141
    %v1143 = vand.u32 %v1142, 4294901760
    %v1144 = vsub.f32 %v1142, %v1143
    %v1145 = vand.u32 %v1144, 4294901760
    %1146 = vmatpush1.msra.mxu0 %v1145
    %1147 = vmatprep.subr.mxu0 0.0
    %v1148 = vand.u32 %v60, 4294901760
    %v1149 = vsub.f32 %v60, %v1148
    %v1150 = vand.u32 %v1149, 4294901760
    %v1151 = vsub.f32 %v1149, %v1150
    %v1152 = vand.u32 %v1151, 4294901760
    %1153 = vmatpush1.msra.mxu0 %v1152
    %1154 = vmatprep.subr.mxu0 0.0
    %v1155 = vand.u32 %v61, 4294901760
    %v1156 = vsub.f32 %v61, %v1155
    %v1157 = vand.u32 %v1156, 4294901760
    %v1158 = vsub.f32 %v1156, %v1157
    %v1159 = vand.u32 %v1158, 4294901760
    %1160 = vmatpush1.msra.mxu0 %v1159
    %1161 = vmatprep.subr.mxu0 0.0
    %v1162 = vand.u32 %v62, 4294901760
    %v1163 = vsub.f32 %v62, %v1162
    %v1164 = vand.u32 %v1163, 4294901760
    %v1165 = vsub.f32 %v1163, %v1164
    %v1166 = vand.u32 %v1165, 4294901760
    %1167 = vmatpush1.msra.mxu0 %v1166
    %1168 = vmatprep.subr.mxu0 0.0
    %v1169 = vand.u32 %v63, 4294901760
    %v1170 = vsub.f32 %v63, %v1169
    %v1171 = vand.u32 %v1170, 4294901760
    %v1172 = vsub.f32 %v1170, %v1171
    %v1173 = vand.u32 %v1172, 4294901760
    %1174 = vmatpush1.msra.mxu0 %v1173
    %1175 = vmatprep.subr.mxu0 0.0
    %v1176 = vand.u32 %v64, 4294901760
    %v1177 = vsub.f32 %v64, %v1176
    %v1178 = vand.u32 %v1177, 4294901760
    %v1179 = vsub.f32 %v1177, %v1178
    %v1180 = vand.u32 %v1179, 4294901760
    %1181 = vmatpush1.msra.mxu0 %v1180
    %1182 = vmatprep.subr.mxu0 0.0
    %v1183 = vand.u32 %v65, 4294901760
    %v1184 = vsub.f32 %v65, %v1183
    %v1185 = vand.u32 %v1184, 4294901760
    %v1186 = vsub.f32 %v1184, %v1185
    %v1187 = vand.u32 %v1186, 4294901760
    %1188 = vmatpush1.msra.mxu0 %v1187
    %1189 = vmatprep.subr.mxu0 0.0
    %v1190 = vand.u32 %v66, 4294901760
    %v1191 = vsub.f32 %v66, %v1190
    %v1192 = vand.u32 %v1191, 4294901760
    %v1193 = vsub.f32 %v1191, %v1192
    %v1194 = vand.u32 %v1193, 4294901760
    %1195 = vmatpush1.msra.mxu0 %v1194
    %1196 = vmatprep.subr.mxu0 0.0
    %v1197 = vand.u32 %v67, 4294901760
    %v1198 = vsub.f32 %v67, %v1197
    %v1199 = vand.u32 %v1198, 4294901760
    %v1200 = vsub.f32 %v1198, %v1199
    %v1201 = vand.u32 %v1200, 4294901760
    %1202 = vmatpush1.msra.mxu0 %v1201
    %1203 = vmatprep.subr.mxu0 0.0
    %v1204 = vand.u32 %v68, 4294901760
    %v1205 = vsub.f32 %v68, %v1204
    %v1206 = vand.u32 %v1205, 4294901760
    %v1207 = vsub.f32 %v1205, %v1206
    %v1208 = vand.u32 %v1207, 4294901760
    %1209 = vmatpush1.msra.mxu0 %v1208
    %1210 = vmatprep.subr.mxu0 0.0
    %v1211 = vand.u32 %v69, 4294901760
    %v1212 = vsub.f32 %v69, %v1211
    %v1213 = vand.u32 %v1212, 4294901760
    %v1214 = vsub.f32 %v1212, %v1213
    %v1215 = vand.u32 %v1214, 4294901760
    %1216 = vmatpush1.msra.mxu0 %v1215
    %1217 = vmatprep.subr.mxu0 0.0
    %v1218 = vand.u32 %v70, 4294901760
    %v1219 = vsub.f32 %v70, %v1218
    %v1220 = vand.u32 %v1219, 4294901760
    %v1221 = vsub.f32 %v1219, %v1220
    %v1222 = vand.u32 %v1221, 4294901760
    %1223 = vmatpush1.msra.mxu0 %v1222
    %1224 = vmatprep.subr.mxu0 0.0
    %v1225 = vand.u32 %v71, 4294901760
    %v1226 = vsub.f32 %v71, %v1225
    %v1227 = vand.u32 %v1226, 4294901760
    %v1228 = vsub.f32 %v1226, %v1227
    %v1229 = vand.u32 %v1228, 4294901760
    %1230 = vmatpush1.msra.mxu0 %v1229
    %1231 = vmatprep.subr.mxu0 0.0
    %v1232 = vand.u32 %v72, 4294901760
    %v1233 = vsub.f32 %v72, %v1232
    %v1234 = vand.u32 %v1233, 4294901760
    %v1235 = vsub.f32 %v1233, %v1234
    %v1236 = vand.u32 %v1235, 4294901760
    %1237 = vmatpush1.msra.mxu0 %v1236
    %1238 = vmatprep.subr.mxu0 0.0
    %v1239 = vand.u32 %v73, 4294901760
    %v1240 = vsub.f32 %v73, %v1239
    %v1241 = vand.u32 %v1240, 4294901760
    %v1242 = vsub.f32 %v1240, %v1241
    %v1243 = vand.u32 %v1242, 4294901760
    %1244 = vmatpush1.msra.mxu0 %v1243
    %1245 = vmatprep.subr.mxu0 0.0
    %v1246 = vand.u32 %v74, 4294901760
    %v1247 = vsub.f32 %v74, %v1246
    %v1248 = vand.u32 %v1247, 4294901760
    %v1249 = vsub.f32 %v1247, %v1248
    %v1250 = vand.u32 %v1249, 4294901760
    %1251 = vmatpush1.msra.mxu0 %v1250
    %1252 = vmatprep.subr.mxu0 0.0
    %v1253 = vand.u32 %v75, 4294901760
    %v1254 = vsub.f32 %v75, %v1253
    %v1255 = vand.u32 %v1254, 4294901760
    %v1256 = vsub.f32 %v1254, %v1255
    %v1257 = vand.u32 %v1256, 4294901760
    %1258 = vmatpush1.msra.mxu0 %v1257
    %1259 = vmatprep.subr.mxu0 0.0
    %v1260 = vand.u32 %v76, 4294901760
    %v1261 = vsub.f32 %v76, %v1260
    %v1262 = vand.u32 %v1261, 4294901760
    %v1263 = vsub.f32 %v1261, %v1262
    %v1264 = vand.u32 %v1263, 4294901760
    %1265 = vmatpush1.msra.mxu0 %v1264
    %1266 = vmatprep.subr.mxu0 0.0
    %v1267 = vand.u32 %v77, 4294901760
    %v1268 = vsub.f32 %v77, %v1267
    %v1269 = vand.u32 %v1268, 4294901760
    %v1270 = vsub.f32 %v1268, %v1269
    %v1271 = vand.u32 %v1270, 4294901760
    %1272 = vmatpush1.msra.mxu0 %v1271
    %1273 = vmatprep.subr.mxu0 0.0
    %v1274 = vand.u32 %v78, 4294901760
    %v1275 = vsub.f32 %v78, %v1274
    %v1276 = vand.u32 %v1275, 4294901760
    %v1277 = vsub.f32 %v1275, %v1276
    %v1278 = vand.u32 %v1277, 4294901760
    %1279 = vmatpush1.msra.mxu0 %v1278
    %1280 = vmatprep.subr.mxu0 0.0
    %v1281 = vand.u32 %v79, 4294901760
    %v1282 = vsub.f32 %v79, %v1281
    %v1283 = vand.u32 %v1282, 4294901760
    %v1284 = vsub.f32 %v1282, %v1283
    %v1285 = vand.u32 %v1284, 4294901760
    %1286 = vmatpush1.msra.mxu0 %v1285
    %1287 = vmatprep.subr.mxu0 0.0
    %v1288 = vand.u32 %v80, 4294901760
    %v1289 = vsub.f32 %v80, %v1288
    %v1290 = vand.u32 %v1289, 4294901760
    %v1291 = vsub.f32 %v1289, %v1290
    %v1292 = vand.u32 %v1291, 4294901760
    %1293 = vmatpush1.msra.mxu0 %v1292
    %1294 = vmatprep.subr.mxu0 0.0
    %v1295 = vand.u32 %v81, 4294901760
    %v1296 = vsub.f32 %v81, %v1295
    %v1297 = vand.u32 %v1296, 4294901760
    %v1298 = vsub.f32 %v1296, %v1297
    %v1299 = vand.u32 %v1298, 4294901760
    %1300 = vmatpush1.msra.mxu0 %v1299
    %1301 = vmatprep.subr.mxu0 0.0
    %v1302 = vand.u32 %v82, 4294901760
    %v1303 = vsub.f32 %v82, %v1302
    %v1304 = vand.u32 %v1303, 4294901760
    %v1305 = vsub.f32 %v1303, %v1304
    %v1306 = vand.u32 %v1305, 4294901760
    %1307 = vmatpush1.msra.mxu0 %v1306
    %1308 = vmatprep.subr.mxu0 0.0
    %v1309 = vand.u32 %v83, 4294901760
    %v1310 = vsub.f32 %v83, %v1309
    %v1311 = vand.u32 %v1310, 4294901760
    %v1312 = vsub.f32 %v1310, %v1311
    %v1313 = vand.u32 %v1312, 4294901760
    %1314 = vmatpush1.msra.mxu0 %v1313
    %1315 = vmatprep.subr.mxu0 0.0
    %v1316 = vand.u32 %v84, 4294901760
    %v1317 = vsub.f32 %v84, %v1316
    %v1318 = vand.u32 %v1317, 4294901760
    %v1319 = vsub.f32 %v1317, %v1318
    %v1320 = vand.u32 %v1319, 4294901760
    %1321 = vmatpush1.msra.mxu0 %v1320
    %1322 = vmatprep.subr.mxu0 0.0
    %v1323 = vand.u32 %v85, 4294901760
    %v1324 = vsub.f32 %v85, %v1323
    %v1325 = vand.u32 %v1324, 4294901760
    %v1326 = vsub.f32 %v1324, %v1325
    %v1327 = vand.u32 %v1326, 4294901760
    %1328 = vmatpush1.msra.mxu0 %v1327
    %v1329 = vand.u32 %v18, 4294901760
    %1330 = vmatprep.mubr.f32.mxu0 %v1329
    %v1331 = vand.u32 %v17, 4294901760
    %1332 = vmatmul.mubr.f32.gmra.mrb[0].mxu0 %v1331
    %v1333 = vpop.f32.mrb[0].mxu0
    %v1334 = vadd.f32 %v1102, %v1333
    %v1335 = vpop.f32.mrb[0].mxu0
    %1336 = vdwg.mxu0
    %1337 = vmatprep.subr.mxu0 0.0
    %v1338 = vand.u32 %v54, 4294901760
    %v1339 = vsub.f32 %v54, %v1338
    %1340 = vmatpush1.msra.mxu0 %v1339
    %1341 = vmatprep.subr.mxu0 0.0
    %v1342 = vand.u32 %v55, 4294901760
    %v1343 = vsub.f32 %v55, %v1342
    %1344 = vmatpush1.msra.mxu0 %v1343
    %1345 = vmatprep.subr.mxu0 0.0
    %v1346 = vand.u32 %v56, 4294901760
    %v1347 = vsub.f32 %v56, %v1346
    %1348 = vmatpush1.msra.mxu0 %v1347
    %1349 = vmatprep.subr.mxu0 0.0
    %v1350 = vand.u32 %v57, 4294901760
    %v1351 = vsub.f32 %v57, %v1350
    %1352 = vmatpush1.msra.mxu0 %v1351
    %1353 = vmatprep.subr.mxu0 0.0
    %v1354 = vand.u32 %v58, 4294901760
    %v1355 = vsub.f32 %v58, %v1354
    %1356 = vmatpush1.msra.mxu0 %v1355
    %1357 = vmatprep.subr.mxu0 0.0
    %v1358 = vand.u32 %v59, 4294901760
    %v1359 = vsub.f32 %v59, %v1358
    %1360 = vmatpush1.msra.mxu0 %v1359
    %1361 = vmatprep.subr.mxu0 0.0
    %v1362 = vand.u32 %v60, 4294901760
    %v1363 = vsub.f32 %v60, %v1362
    %1364 = vmatpush1.msra.mxu0 %v1363
    %1365 = vmatprep.subr.mxu0 0.0
    %v1366 = vand.u32 %v61, 4294901760
    %v1367 = vsub.f32 %v61, %v1366
    %1368 = vmatpush1.msra.mxu0 %v1367
    %1369 = vmatprep.subr.mxu0 0.0
    %v1370 = vand.u32 %v62, 4294901760
    %v1371 = vsub.f32 %v62, %v1370
    %1372 = vmatpush1.msra.mxu0 %v1371
    %1373 = vmatprep.subr.mxu0 0.0
    %v1374 = vand.u32 %v63, 4294901760
    %v1375 = vsub.f32 %v63, %v1374
    %1376 = vmatpush1.msra.mxu0 %v1375
    %1377 = vmatprep.subr.mxu0 0.0
    %v1378 = vand.u32 %v64, 4294901760
    %v1379 = vsub.f32 %v64, %v1378
    %1380 = vmatpush1.msra.mxu0 %v1379
    %1381 = vmatprep.subr.mxu0 0.0
    %v1382 = vand.u32 %v65, 4294901760
    %v1383 = vsub.f32 %v65, %v1382
    %1384 = vmatpush1.msra.mxu0 %v1383
    %1385 = vmatprep.subr.mxu0 0.0
    %v1386 = vand.u32 %v66, 4294901760
    %v1387 = vsub.f32 %v66, %v1386
    %1388 = vmatpush1.msra.mxu0 %v1387
    %1389 = vmatprep.subr.mxu0 0.0
    %v1390 = vand.u32 %v67, 4294901760
    %v1391 = vsub.f32 %v67, %v1390
    %1392 = vmatpush1.msra.mxu0 %v1391
    %1393 = vmatprep.subr.mxu0 0.0
    %v1394 = vand.u32 %v68, 4294901760
    %v1395 = vsub.f32 %v68, %v1394
    %1396 = vmatpush1.msra.mxu0 %v1395
    %1397 = vmatprep.subr.mxu0 0.0
    %v1398 = vand.u32 %v69, 4294901760
    %v1399 = vsub.f32 %v69, %v1398
    %1400 = vmatpush1.msra.mxu0 %v1399
    %1401 = vmatprep.subr.mxu0 0.0
    %v1402 = vand.u32 %v70, 4294901760
    %v1403 = vsub.f32 %v70, %v1402
    %1404 = vmatpush1.msra.mxu0 %v1403
    %1405 = vmatprep.subr.mxu0 0.0
    %v1406 = vand.u32 %v71, 4294901760
    %v1407 = vsub.f32 %v71, %v1406
    %1408 = vmatpush1.msra.mxu0 %v1407
    %1409 = vmatprep.subr.mxu0 0.0
    %v1410 = vand.u32 %v72, 4294901760
    %v1411 = vsub.f32 %v72, %v1410
    %1412 = vmatpush1.msra.mxu0 %v1411
    %1413 = vmatprep.subr.mxu0 0.0
    %v1414 = vand.u32 %v73, 4294901760
    %v1415 = vsub.f32 %v73, %v1414
    %1416 = vmatpush1.msra.mxu0 %v1415
    %1417 = vmatprep.subr.mxu0 0.0
    %v1418 = vand.u32 %v74, 4294901760
    %v1419 = vsub.f32 %v74, %v1418
    %1420 = vmatpush1.msra.mxu0 %v1419
    %1421 = vmatprep.subr.mxu0 0.0
    %v1422 = vand.u32 %v75, 4294901760
    %v1423 = vsub.f32 %v75, %v1422
    %1424 = vmatpush1.msra.mxu0 %v1423
    %1425 = vmatprep.subr.mxu0 0.0
    %v1426 = vand.u32 %v76, 4294901760
    %v1427 = vsub.f32 %v76, %v1426
    %1428 = vmatpush1.msra.mxu0 %v1427
    %1429 = vmatprep.subr.mxu0 0.0
    %v1430 = vand.u32 %v77, 4294901760
    %v1431 = vsub.f32 %v77, %v1430
    %1432 = vmatpush1.msra.mxu0 %v1431
    %1433 = vmatprep.subr.mxu0 0.0
    %v1434 = vand.u32 %v78, 4294901760
    %v1435 = vsub.f32 %v78, %v1434
    %1436 = vmatpush1.msra.mxu0 %v1435
    %1437 = vmatprep.subr.mxu0 0.0
    %v1438 = vand.u32 %v79, 4294901760
    %v1439 = vsub.f32 %v79, %v1438
    %1440 = vmatpush1.msra.mxu0 %v1439
    %1441 = vmatprep.subr.mxu0 0.0
    %v1442 = vand.u32 %v80, 4294901760
    %v1443 = vsub.f32 %v80, %v1442
    %1444 = vmatpush1.msra.mxu0 %v1443
    %1445 = vmatprep.subr.mxu0 0.0
    %v1446 = vand.u32 %v81, 4294901760
    %v1447 = vsub.f32 %v81, %v1446
    %1448 = vmatpush1.msra.mxu0 %v1447
    %1449 = vmatprep.subr.mxu0 0.0
    %v1450 = vand.u32 %v82, 4294901760
    %v1451 = vsub.f32 %v82, %v1450
    %1452 = vmatpush1.msra.mxu0 %v1451
    %1453 = vmatprep.subr.mxu0 0.0
    %v1454 = vand.u32 %v83, 4294901760
    %v1455 = vsub.f32 %v83, %v1454
    %1456 = vmatpush1.msra.mxu0 %v1455
    %1457 = vmatprep.subr.mxu0 0.0
    %v1458 = vand.u32 %v84, 4294901760
    %v1459 = vsub.f32 %v84, %v1458
    %1460 = vmatpush1.msra.mxu0 %v1459
    %1461 = vmatprep.subr.mxu0 0.0
    %v1462 = vand.u32 %v85, 4294901760
    %v1463 = vsub.f32 %v85, %v1462
    %1464 = vmatpush1.msra.mxu0 %v1463
    %v1465 = vand.u32 %v18, 4294901760
    %v1466 = vsub.f32 %v18, %v1465
    %1467 = vmatprep.mubr.f32.mxu0 %v1466
    %v1468 = vand.u32 %v17, 4294901760
    %v1469 = vsub.f32 %v17, %v1468
    %1470 = vmatmul.mubr.f32.gmra.mrb[0].mxu0 %v1469
    %v1471 = vpop.f32.mrb[0].mxu0
    %v1472 = vadd.f32 %v1334, %v1471
    %v1473 = vpop.f32.mrb[0].mxu0
    %1474 = vdwg.mxu0
    %1475 = vmatprep.subr.mxu0 0.0
    %v1476 = vand.u32 %v54, 4294901760
    %1477 = vmatpush1.msra.mxu0 %v1476
    %1478 = vmatprep.subr.mxu0 0.0
    %v1479 = vand.u32 %v55, 4294901760
    %1480 = vmatpush1.msra.mxu0 %v1479
    %1481 = vmatprep.subr.mxu0 0.0
    %v1482 = vand.u32 %v56, 4294901760
    %1483 = vmatpush1.msra.mxu0 %v1482
    %1484 = vmatprep.subr.mxu0 0.0
    %v1485 = vand.u32 %v57, 4294901760
    %1486 = vmatpush1.msra.mxu0 %v1485
    %1487 = vmatprep.subr.mxu0 0.0
    %v1488 = vand.u32 %v58, 4294901760
    %1489 = vmatpush1.msra.mxu0 %v1488
    %1490 = vmatprep.subr.mxu0 0.0
    %v1491 = vand.u32 %v59, 4294901760
    %1492 = vmatpush1.msra.mxu0 %v1491
    %1493 = vmatprep.subr.mxu0 0.0
    %v1494 = vand.u32 %v60, 4294901760
    %1495 = vmatpush1.msra.mxu0 %v1494
    %1496 = vmatprep.subr.mxu0 0.0
    %v1497 = vand.u32 %v61, 4294901760
    %1498 = vmatpush1.msra.mxu0 %v1497
    %1499 = vmatprep.subr.mxu0 0.0
    %v1500 = vand.u32 %v62, 4294901760
    %1501 = vmatpush1.msra.mxu0 %v1500
    %1502 = vmatprep.subr.mxu0 0.0
    %v1503 = vand.u32 %v63, 4294901760
    %1504 = vmatpush1.msra.mxu0 %v1503
    %1505 = vmatprep.subr.mxu0 0.0
    %v1506 = vand.u32 %v64, 4294901760
    %1507 = vmatpush1.msra.mxu0 %v1506
    %1508 = vmatprep.subr.mxu0 0.0
    %v1509 = vand.u32 %v65, 4294901760
    %1510 = vmatpush1.msra.mxu0 %v1509
    %1511 = vmatprep.subr.mxu0 0.0
    %v1512 = vand.u32 %v66, 4294901760
    %1513 = vmatpush1.msra.mxu0 %v1512
    %1514 = vmatprep.subr.mxu0 0.0
    %v1515 = vand.u32 %v67, 4294901760
    %1516 = vmatpush1.msra.mxu0 %v1515
    %1517 = vmatprep.subr.mxu0 0.0
    %v1518 = vand.u32 %v68, 4294901760
    %1519 = vmatpush1.msra.mxu0 %v1518
    %1520 = vmatprep.subr.mxu0 0.0
    %v1521 = vand.u32 %v69, 4294901760
    %1522 = vmatpush1.msra.mxu0 %v1521
    %1523 = vmatprep.subr.mxu0 0.0
    %v1524 = vand.u32 %v70, 4294901760
    %1525 = vmatpush1.msra.mxu0 %v1524
    %1526 = vmatprep.subr.mxu0 0.0
    %v1527 = vand.u32 %v71, 4294901760
    %1528 = vmatpush1.msra.mxu0 %v1527
    %1529 = vmatprep.subr.mxu0 0.0
    %v1530 = vand.u32 %v72, 4294901760
    %1531 = vmatpush1.msra.mxu0 %v1530
    %1532 = vmatprep.subr.mxu0 0.0
    %v1533 = vand.u32 %v73, 4294901760
    %1534 = vmatpush1.msra.mxu0 %v1533
    %1535 = vmatprep.subr.mxu0 0.0
    %v1536 = vand.u32 %v74, 4294901760
    %1537 = vmatpush1.msra.mxu0 %v1536
    %1538 = vmatprep.subr.mxu0 0.0
    %v1539 = vand.u32 %v75, 4294901760
    %1540 = vmatpush1.msra.mxu0 %v1539
    %1541 = vmatprep.subr.mxu0 0.0
    %v1542 = vand.u32 %v76, 4294901760
    %1543 = vmatpush1.msra.mxu0 %v1542
    %1544 = vmatprep.subr.mxu0 0.0
    %v1545 = vand.u32 %v77, 4294901760
    %1546 = vmatpush1.msra.mxu0 %v1545
    %1547 = vmatprep.subr.mxu0 0.0
    %v1548 = vand.u32 %v78, 4294901760
    %1549 = vmatpush1.msra.mxu0 %v1548
    %1550 = vmatprep.subr.mxu0 0.0
    %v1551 = vand.u32 %v79, 4294901760
    %1552 = vmatpush1.msra.mxu0 %v1551
    %1553 = vmatprep.subr.mxu0 0.0
    %v1554 = vand.u32 %v80, 4294901760
    %1555 = vmatpush1.msra.mxu0 %v1554
    %1556 = vmatprep.subr.mxu0 0.0
    %v1557 = vand.u32 %v81, 4294901760
    %1558 = vmatpush1.msra.mxu0 %v1557
    %1559 = vmatprep.subr.mxu0 0.0
    %v1560 = vand.u32 %v82, 4294901760
    %1561 = vmatpush1.msra.mxu0 %v1560
    %1562 = vmatprep.subr.mxu0 0.0
    %v1563 = vand.u32 %v83, 4294901760
    %1564 = vmatpush1.msra.mxu0 %v1563
    %1565 = vmatprep.subr.mxu0 0.0
    %v1566 = vand.u32 %v84, 4294901760
    %1567 = vmatpush1.msra.mxu0 %v1566
    %1568 = vmatprep.subr.mxu0 0.0
    %v1569 = vand.u32 %v85, 4294901760
    %1570 = vmatpush1.msra.mxu0 %v1569
    %v1571 = vand.u32 %v18, 4294901760
    %v1572 = vsub.f32 %v18, %v1571
    %v1573 = vand.u32 %v1572, 4294901760
    %1574 = vmatprep.mubr.f32.mxu0 %v1573
    %v1575 = vand.u32 %v17, 4294901760
    %v1576 = vsub.f32 %v17, %v1575
    %v1577 = vand.u32 %v1576, 4294901760
    %1578 = vmatmul.mubr.f32.gmra.mrb[0].mxu0 %v1577
    %v1579 = vpop.f32.mrb[0].mxu0
    %v1580 = vadd.f32 %v1472, %v1579
    %v1581 = vpop.f32.mrb[0].mxu0
    %1582 = vdwg.mxu0
    %1583 = vmatprep.subr.mxu0 0.0
    %v1584 = vand.u32 %v54, 4294901760
    %v1585 = vsub.f32 %v54, %v1584
    %v1586 = vand.u32 %v1585, 4294901760
    %1587 = vmatpush1.msra.mxu0 %v1586
    %1588 = vmatprep.subr.mxu0 0.0
    %v1589 = vand.u32 %v55, 4294901760
    %v1590 = vsub.f32 %v55, %v1589
    %v1591 = vand.u32 %v1590, 4294901760
    %1592 = vmatpush1.msra.mxu0 %v1591
    %1593 = vmatprep.subr.mxu0 0.0
    %v1594 = vand.u32 %v56, 4294901760
    %v1595 = vsub.f32 %v56, %v1594
    %v1596 = vand.u32 %v1595, 4294901760
    %1597 = vmatpush1.msra.mxu0 %v1596
    %1598 = vmatprep.subr.mxu0 0.0
    %v1599 = vand.u32 %v57, 4294901760
    %v1600 = vsub.f32 %v57, %v1599
    %v1601 = vand.u32 %v1600, 4294901760
    %1602 = vmatpush1.msra.mxu0 %v1601
    %1603 = vmatprep.subr.mxu0 0.0
    %v1604 = vand.u32 %v58, 4294901760
    %v1605 = vsub.f32 %v58, %v1604
    %v1606 = vand.u32 %v1605, 4294901760
    %1607 = vmatpush1.msra.mxu0 %v1606
    %1608 = vmatprep.subr.mxu0 0.0
    %v1609 = vand.u32 %v59, 4294901760
    %v1610 = vsub.f32 %v59, %v1609
    %v1611 = vand.u32 %v1610, 4294901760
    %1612 = vmatpush1.msra.mxu0 %v1611
    %1613 = vmatprep.subr.mxu0 0.0
    %v1614 = vand.u32 %v60, 4294901760
    %v1615 = vsub.f32 %v60, %v1614
    %v1616 = vand.u32 %v1615, 4294901760
    %1617 = vmatpush1.msra.mxu0 %v1616
    %1618 = vmatprep.subr.mxu0 0.0
    %v1619 = vand.u32 %v61, 4294901760
    %v1620 = vsub.f32 %v61, %v1619
    %v1621 = vand.u32 %v1620, 4294901760
    %1622 = vmatpush1.msra.mxu0 %v1621
    %1623 = vmatprep.subr.mxu0 0.0
    %v1624 = vand.u32 %v62, 4294901760
    %v1625 = vsub.f32 %v62, %v1624
    %v1626 = vand.u32 %v1625, 4294901760
    %1627 = vmatpush1.msra.mxu0 %v1626
    %1628 = vmatprep.subr.mxu0 0.0
    %v1629 = vand.u32 %v63, 4294901760
    %v1630 = vsub.f32 %v63, %v1629
    %v1631 = vand.u32 %v1630, 4294901760
    %1632 = vmatpush1.msra.mxu0 %v1631
    %1633 = vmatprep.subr.mxu0 0.0
    %v1634 = vand.u32 %v64, 4294901760
    %v1635 = vsub.f32 %v64, %v1634
    %v1636 = vand.u32 %v1635, 4294901760
    %1637 = vmatpush1.msra.mxu0 %v1636
    %1638 = vmatprep.subr.mxu0 0.0
    %v1639 = vand.u32 %v65, 4294901760
    %v1640 = vsub.f32 %v65, %v1639
    %v1641 = vand.u32 %v1640, 4294901760
    %1642 = vmatpush1.msra.mxu0 %v1641
    %1643 = vmatprep.subr.mxu0 0.0
    %v1644 = vand.u32 %v66, 4294901760
    %v1645 = vsub.f32 %v66, %v1644
    %v1646 = vand.u32 %v1645, 4294901760
    %1647 = vmatpush1.msra.mxu0 %v1646
    %1648 = vmatprep.subr.mxu0 0.0
    %v1649 = vand.u32 %v67, 4294901760
    %v1650 = vsub.f32 %v67, %v1649
    %v1651 = vand.u32 %v1650, 4294901760
    %1652 = vmatpush1.msra.mxu0 %v1651
    %1653 = vmatprep.subr.mxu0 0.0
    %v1654 = vand.u32 %v68, 4294901760
    %v1655 = vsub.f32 %v68, %v1654
    %v1656 = vand.u32 %v1655, 4294901760
    %1657 = vmatpush1.msra.mxu0 %v1656
    %1658 = vmatprep.subr.mxu0 0.0
    %v1659 = vand.u32 %v69, 4294901760
    %v1660 = vsub.f32 %v69, %v1659
    %v1661 = vand.u32 %v1660, 4294901760
    %1662 = vmatpush1.msra.mxu0 %v1661
    %1663 = vmatprep.subr.mxu0 0.0
    %v1664 = vand.u32 %v70, 4294901760
    %v1665 = vsub.f32 %v70, %v1664
    %v1666 = vand.u32 %v1665, 4294901760
    %1667 = vmatpush1.msra.mxu0 %v1666
    %1668 = vmatprep.subr.mxu0 0.0
    %v1669 = vand.u32 %v71, 4294901760
    %v1670 = vsub.f32 %v71, %v1669
    %v1671 = vand.u32 %v1670, 4294901760
    %1672 = vmatpush1.msra.mxu0 %v1671
    %1673 = vmatprep.subr.mxu0 0.0
    %v1674 = vand.u32 %v72, 4294901760
    %v1675 = vsub.f32 %v72, %v1674
    %v1676 = vand.u32 %v1675, 4294901760
    %1677 = vmatpush1.msra.mxu0 %v1676
    %1678 = vmatprep.subr.mxu0 0.0
    %v1679 = vand.u32 %v73, 4294901760
    %v1680 = vsub.f32 %v73, %v1679
    %v1681 = vand.u32 %v1680, 4294901760
    %1682 = vmatpush1.msra.mxu0 %v1681
    %1683 = vmatprep.subr.mxu0 0.0
    %v1684 = vand.u32 %v74, 4294901760
    %v1685 = vsub.f32 %v74, %v1684
    %v1686 = vand.u32 %v1685, 4294901760
    %1687 = vmatpush1.msra.mxu0 %v1686
    %1688 = vmatprep.subr.mxu0 0.0
    %v1689 = vand.u32 %v75, 4294901760
    %v1690 = vsub.f32 %v75, %v1689
    %v1691 = vand.u32 %v1690, 4294901760
    %1692 = vmatpush1.msra.mxu0 %v1691
    %1693 = vmatprep.subr.mxu0 0.0
    %v1694 = vand.u32 %v76, 4294901760
    %v1695 = vsub.f32 %v76, %v1694
    %v1696 = vand.u32 %v1695, 4294901760
    %1697 = vmatpush1.msra.mxu0 %v1696
    %1698 = vmatprep.subr.mxu0 0.0
    %v1699 = vand.u32 %v77, 4294901760
    %v1700 = vsub.f32 %v77, %v1699
    %v1701 = vand.u32 %v1700, 4294901760
    %1702 = vmatpush1.msra.mxu0 %v1701
    %1703 = vmatprep.subr.mxu0 0.0
    %v1704 = vand.u32 %v78, 4294901760
    %v1705 = vsub.f32 %v78, %v1704
    %v1706 = vand.u32 %v1705, 4294901760
    %1707 = vmatpush1.msra.mxu0 %v1706
    %1708 = vmatprep.subr.mxu0 0.0
    %v1709 = vand.u32 %v79, 4294901760
    %v1710 = vsub.f32 %v79, %v1709
    %v1711 = vand.u32 %v1710, 4294901760
    %1712 = vmatpush1.msra.mxu0 %v1711
    %1713 = vmatprep.subr.mxu0 0.0
    %v1714 = vand.u32 %v80, 4294901760
    %v1715 = vsub.f32 %v80, %v1714
    %v1716 = vand.u32 %v1715, 4294901760
    %1717 = vmatpush1.msra.mxu0 %v1716
    %1718 = vmatprep.subr.mxu0 0.0
    %v1719 = vand.u32 %v81, 4294901760
    %v1720 = vsub.f32 %v81, %v1719
    %v1721 = vand.u32 %v1720, 4294901760
    %1722 = vmatpush1.msra.mxu0 %v1721
    %1723 = vmatprep.subr.mxu0 0.0
    %v1724 = vand.u32 %v82, 4294901760
    %v1725 = vsub.f32 %v82, %v1724
    %v1726 = vand.u32 %v1725, 4294901760
    %1727 = vmatpush1.msra.mxu0 %v1726
    %1728 = vmatprep.subr.mxu0 0.0
    %v1729 = vand.u32 %v83, 4294901760
    %v1730 = vsub.f32 %v83, %v1729
    %v1731 = vand.u32 %v1730, 4294901760
    %1732 = vmatpush1.msra.mxu0 %v1731
    %1733 = vmatprep.subr.mxu0 0.0
    %v1734 = vand.u32 %v84, 4294901760
    %v1735 = vsub.f32 %v84, %v1734
    %v1736 = vand.u32 %v1735, 4294901760
    %1737 = vmatpush1.msra.mxu0 %v1736
    %1738 = vmatprep.subr.mxu0 0.0
    %v1739 = vand.u32 %v85, 4294901760
    %v1740 = vsub.f32 %v85, %v1739
    %v1741 = vand.u32 %v1740, 4294901760
    %1742 = vmatpush1.msra.mxu0 %v1741
    %v1743 = vand.u32 %v18, 4294901760
    %1744 = vmatprep.mubr.f32.mxu0 %v1743
    %v1745 = vand.u32 %v17, 4294901760
    %1746 = vmatmul.mubr.f32.gmra.mrb[0].mxu0 %v1745
    %v1747 = vpop.f32.mrb[0].mxu0
    %v1748 = vadd.f32 %v1580, %v1747
    %v1749 = vpop.f32.mrb[0].mxu0
    %1750 = vdwg.mxu0
    %1751 = vmatprep.subr.mxu0 0.0
    %v1752 = vand.u32 %v54, 4294901760
    %1753 = vmatpush1.msra.mxu0 %v1752
    %1754 = vmatprep.subr.mxu0 0.0
    %v1755 = vand.u32 %v55, 4294901760
    %1756 = vmatpush1.msra.mxu0 %v1755
    %1757 = vmatprep.subr.mxu0 0.0
    %v1758 = vand.u32 %v56, 4294901760
    %1759 = vmatpush1.msra.mxu0 %v1758
    %1760 = vmatprep.subr.mxu0 0.0
    %v1761 = vand.u32 %v57, 4294901760
    %1762 = vmatpush1.msra.mxu0 %v1761
    %1763 = vmatprep.subr.mxu0 0.0
    %v1764 = vand.u32 %v58, 4294901760
    %1765 = vmatpush1.msra.mxu0 %v1764
    %1766 = vmatprep.subr.mxu0 0.0
    %v1767 = vand.u32 %v59, 4294901760
    %1768 = vmatpush1.msra.mxu0 %v1767
    %1769 = vmatprep.subr.mxu0 0.0
    %v1770 = vand.u32 %v60, 4294901760
    %1771 = vmatpush1.msra.mxu0 %v1770
    %1772 = vmatprep.subr.mxu0 0.0
    %v1773 = vand.u32 %v61, 4294901760
    %1774 = vmatpush1.msra.mxu0 %v1773
    %1775 = vmatprep.subr.mxu0 0.0
    %v1776 = vand.u32 %v62, 4294901760
    %1777 = vmatpush1.msra.mxu0 %v1776
    %1778 = vmatprep.subr.mxu0 0.0
    %v1779 = vand.u32 %v63, 4294901760
    %1780 = vmatpush1.msra.mxu0 %v1779
    %1781 = vmatprep.subr.mxu0 0.0
    %v1782 = vand.u32 %v64, 4294901760
    %1783 = vmatpush1.msra.mxu0 %v1782
    %1784 = vmatprep.subr.mxu0 0.0
    %v1785 = vand.u32 %v65, 4294901760
    %1786 = vmatpush1.msra.mxu0 %v1785
    %1787 = vmatprep.subr.mxu0 0.0
    %v1788 = vand.u32 %v66, 4294901760
    %1789 = vmatpush1.msra.mxu0 %v1788
    %1790 = vmatprep.subr.mxu0 0.0
    %v1791 = vand.u32 %v67, 4294901760
    %1792 = vmatpush1.msra.mxu0 %v1791
    %1793 = vmatprep.subr.mxu0 0.0
    %v1794 = vand.u32 %v68, 4294901760
    %1795 = vmatpush1.msra.mxu0 %v1794
    %1796 = vmatprep.subr.mxu0 0.0
    %v1797 = vand.u32 %v69, 4294901760
    %1798 = vmatpush1.msra.mxu0 %v1797
    %1799 = vmatprep.subr.mxu0 0.0
    %v1800 = vand.u32 %v70, 4294901760
    %1801 = vmatpush1.msra.mxu0 %v1800
    %1802 = vmatprep.subr.mxu0 0.0
    %v1803 = vand.u32 %v71, 4294901760
    %1804 = vmatpush1.msra.mxu0 %v1803
    %1805 = vmatprep.subr.mxu0 0.0
    %v1806 = vand.u32 %v72, 4294901760
    %1807 = vmatpush1.msra.mxu0 %v1806
    %1808 = vmatprep.subr.mxu0 0.0
    %v1809 = vand.u32 %v73, 4294901760
    %1810 = vmatpush1.msra.mxu0 %v1809
    %1811 = vmatprep.subr.mxu0 0.0
    %v1812 = vand.u32 %v74, 4294901760
    %1813 = vmatpush1.msra.mxu0 %v1812
    %1814 = vmatprep.subr.mxu0 0.0
    %v1815 = vand.u32 %v75, 4294901760
    %1816 = vmatpush1.msra.mxu0 %v1815
    %1817 = vmatprep.subr.mxu0 0.0
    %v1818 = vand.u32 %v76, 4294901760
    %1819 = vmatpush1.msra.mxu0 %v1818
    %1820 = vmatprep.subr.mxu0 0.0
    %v1821 = vand.u32 %v77, 4294901760
    %1822 = vmatpush1.msra.mxu0 %v1821
    %1823 = vmatprep.subr.mxu0 0.0
    %v1824 = vand.u32 %v78, 4294901760
    %1825 = vmatpush1.msra.mxu0 %v1824
    %1826 = vmatprep.subr.mxu0 0.0
    %v1827 = vand.u32 %v79, 4294901760
    %1828 = vmatpush1.msra.mxu0 %v1827
    %1829 = vmatprep.subr.mxu0 0.0
    %v1830 = vand.u32 %v80, 4294901760
    %1831 = vmatpush1.msra.mxu0 %v1830
    %1832 = vmatprep.subr.mxu0 0.0
    %v1833 = vand.u32 %v81, 4294901760
    %1834 = vmatpush1.msra.mxu0 %v1833
    %1835 = vmatprep.subr.mxu0 0.0
    %v1836 = vand.u32 %v82, 4294901760
    %1837 = vmatpush1.msra.mxu0 %v1836
    %1838 = vmatprep.subr.mxu0 0.0
    %v1839 = vand.u32 %v83, 4294901760
    %1840 = vmatpush1.msra.mxu0 %v1839
    %1841 = vmatprep.subr.mxu0 0.0
    %v1842 = vand.u32 %v84, 4294901760
    %1843 = vmatpush1.msra.mxu0 %v1842
    %1844 = vmatprep.subr.mxu0 0.0
    %v1845 = vand.u32 %v85, 4294901760
    %1846 = vmatpush1.msra.mxu0 %v1845
    %v1847 = vand.u32 %v18, 4294901760
    %1848 = vmatprep.mubr.f32.mxu0 %v1847
    %v1849 = vand.u32 %v17, 4294901760
    %1850 = vmatmul.mubr.f32.gmra.mrb[0].mxu0 %v1849
    %v1851 = vpop.f32.mrb[0].mxu0
    %v1852 = vadd.f32 %v1748, %v1851
    %v1853 = vpop.f32.mrb[0].mxu0
    %1854 = vdwg.mxu0
    %1855 = vmatprep.subr.mxu0 0.0
    %v1856 = vand.u32 %v86, 4294901760
    %1857 = vmatpush1.msra.mxu0 %v1856
    %1858 = vmatprep.subr.mxu0 0.0
    %v1859 = vand.u32 %v87, 4294901760
    %1860 = vmatpush1.msra.mxu0 %v1859
    %1861 = vmatprep.subr.mxu0 0.0
    %v1862 = vand.u32 %v88, 4294901760
    %1863 = vmatpush1.msra.mxu0 %v1862
    %1864 = vmatprep.subr.mxu0 0.0
    %v1865 = vand.u32 %v89, 4294901760
    %1866 = vmatpush1.msra.mxu0 %v1865
    %1867 = vmatprep.subr.mxu0 0.0
    %v1868 = vand.u32 %v90, 4294901760
    %1869 = vmatpush1.msra.mxu0 %v1868
    %1870 = vmatprep.subr.mxu0 0.0
    %v1871 = vand.u32 %v91, 4294901760
    %1872 = vmatpush1.msra.mxu0 %v1871
    %1873 = vmatprep.subr.mxu0 0.0
    %v1874 = vand.u32 %v92, 4294901760
    %1875 = vmatpush1.msra.mxu0 %v1874
    %1876 = vmatprep.subr.mxu0 0.0
    %v1877 = vand.u32 %v93, 4294901760
    %1878 = vmatpush1.msra.mxu0 %v1877
    %1879 = vmatprep.subr.mxu0 0.0
    %v1880 = vand.u32 %v94, 4294901760
    %1881 = vmatpush1.msra.mxu0 %v1880
    %1882 = vmatprep.subr.mxu0 0.0
    %v1883 = vand.u32 %v95, 4294901760
    %1884 = vmatpush1.msra.mxu0 %v1883
    %1885 = vmatprep.subr.mxu0 0.0
    %v1886 = vand.u32 %v96, 4294901760
    %1887 = vmatpush1.msra.mxu0 %v1886
    %1888 = vmatprep.subr.mxu0 0.0
    %v1889 = vand.u32 %v97, 4294901760
    %1890 = vmatpush1.msra.mxu0 %v1889
    %1891 = vmatprep.subr.mxu0 0.0
    %v1892 = vand.u32 %v98, 4294901760
    %1893 = vmatpush1.msra.mxu0 %v1892
    %1894 = vmatprep.subr.mxu0 0.0
    %v1895 = vand.u32 %v99, 4294901760
    %1896 = vmatpush1.msra.mxu0 %v1895
    %1897 = vmatprep.subr.mxu0 0.0
    %v1898 = vand.u32 %v100, 4294901760
    %1899 = vmatpush1.msra.mxu0 %v1898
    %1900 = vmatprep.subr.mxu0 0.0
    %v1901 = vand.u32 %v101, 4294901760
    %1902 = vmatpush1.msra.mxu0 %v1901
    %1903 = vmatprep.subr.mxu0 0.0
    %v1904 = vand.u32 %v102, 4294901760
    %1905 = vmatpush1.msra.mxu0 %v1904
    %1906 = vmatprep.subr.mxu0 0.0
    %v1907 = vand.u32 %v103, 4294901760
    %1908 = vmatpush1.msra.mxu0 %v1907
    %1909 = vmatprep.subr.mxu0 0.0
    %v1910 = vand.u32 %v104, 4294901760
    %1911 = vmatpush1.msra.mxu0 %v1910
    %1912 = vmatprep.subr.mxu0 0.0
    %v1913 = vand.u32 %v105, 4294901760
    %1914 = vmatpush1.msra.mxu0 %v1913
    %1915 = vmatprep.subr.mxu0 0.0
    %v1916 = vand.u32 %v106, 4294901760
    %1917 = vmatpush1.msra.mxu0 %v1916
    %1918 = vmatprep.subr.mxu0 0.0
    %v1919 = vand.u32 %v107, 4294901760
    %1920 = vmatpush1.msra.mxu0 %v1919
    %1921 = vmatprep.subr.mxu0 0.0
    %v1922 = vand.u32 %v108, 4294901760
    %1923 = vmatpush1.msra.mxu0 %v1922
    %1924 = vmatprep.subr.mxu0 0.0
    %v1925 = vand.u32 %v109, 4294901760
    %1926 = vmatpush1.msra.mxu0 %v1925
    %1927 = vmatprep.subr.mxu0 0.0
    %v1928 = vand.u32 %v110, 4294901760
    %1929 = vmatpush1.msra.mxu0 %v1928
    %1930 = vmatprep.subr.mxu0 0.0
    %v1931 = vand.u32 %v111, 4294901760
    %1932 = vmatpush1.msra.mxu0 %v1931
    %1933 = vmatprep.subr.mxu0 0.0
    %v1934 = vand.u32 %v112, 4294901760
    %1935 = vmatpush1.msra.mxu0 %v1934
    %1936 = vmatprep.subr.mxu0 0.0
    %v1937 = vand.u32 %v113, 4294901760
    %1938 = vmatpush1.msra.mxu0 %v1937
    %1939 = vmatprep.subr.mxu0 0.0
    %v1940 = vand.u32 %v114, 4294901760
    %1941 = vmatpush1.msra.mxu0 %v1940
    %1942 = vmatprep.subr.mxu0 0.0
    %v1943 = vand.u32 %v115, 4294901760
    %1944 = vmatpush1.msra.mxu0 %v1943
    %1945 = vmatprep.subr.mxu0 0.0
    %v1946 = vand.u32 %v116, 4294901760
    %1947 = vmatpush1.msra.mxu0 %v1946
    %1948 = vmatprep.subr.mxu0 0.0
    %v1949 = vand.u32 %v117, 4294901760
    %1950 = vmatpush1.msra.mxu0 %v1949
    %v1951 = vand.u32 %v20, 4294901760
    %v1952 = vsub.f32 %v20, %v1951
    %v1953 = vand.u32 %v1952, 4294901760
    %v1954 = vsub.f32 %v1952, %v1953
    %v1955 = vand.u32 %v1954, 4294901760
    %1956 = vmatprep.mubr.f32.mxu0 %v1955
    %v1957 = vand.u32 %v19, 4294901760
    %v1958 = vsub.f32 %v19, %v1957
    %v1959 = vand.u32 %v1958, 4294901760
    %v1960 = vsub.f32 %v1958, %v1959
    %v1961 = vand.u32 %v1960, 4294901760
    %1962 = vmatmul.mubr.f32.gmra.mrb[0].mxu0 %v1961
    %v1963 = vpop.f32.mrb[0].mxu0
    %v1964 = vadd.f32 %v1852, %v1963
    %v1965 = vpop.f32.mrb[0].mxu0
    %1966 = vdwg.mxu0
    %1967 = vmatprep.subr.mxu0 0.0
    %v1968 = vand.u32 %v86, 4294901760
    %v1969 = vsub.f32 %v86, %v1968
    %v1970 = vand.u32 %v1969, 4294901760
    %v1971 = vsub.f32 %v1969, %v1970
    %v1972 = vand.u32 %v1971, 4294901760
    %1973 = vmatpush1.msra.mxu0 %v1972
    %1974 = vmatprep.subr.mxu0 0.0
    %v1975 = vand.u32 %v87, 4294901760
    %v1976 = vsub.f32 %v87, %v1975
    %v1977 = vand.u32 %v1976, 4294901760
    %v1978 = vsub.f32 %v1976, %v1977
    %v1979 = vand.u32 %v1978, 4294901760
    %1980 = vmatpush1.msra.mxu0 %v1979
    %1981 = vmatprep.subr.mxu0 0.0
    %v1982 = vand.u32 %v88, 4294901760
    %v1983 = vsub.f32 %v88, %v1982
    %v1984 = vand.u32 %v1983, 4294901760
    %v1985 = vsub.f32 %v1983, %v1984
    %v1986 = vand.u32 %v1985, 4294901760
    %1987 = vmatpush1.msra.mxu0 %v1986
    %1988 = vmatprep.subr.mxu0 0.0
    %v1989 = vand.u32 %v89, 4294901760
    %v1990 = vsub.f32 %v89, %v1989
    %v1991 = vand.u32 %v1990, 4294901760
    %v1992 = vsub.f32 %v1990, %v1991
    %v1993 = vand.u32 %v1992, 4294901760
    %1994 = vmatpush1.msra.mxu0 %v1993
    %1995 = vmatprep.subr.mxu0 0.0
    %v1996 = vand.u32 %v90, 4294901760
    %v1997 = vsub.f32 %v90, %v1996
    %v1998 = vand.u32 %v1997, 4294901760
    %v1999 = vsub.f32 %v1997, %v1998
    %v2000 = vand.u32 %v1999, 4294901760
    %2001 = vmatpush1.msra.mxu0 %v2000
    %2002 = vmatprep.subr.mxu0 0.0
    %v2003 = vand.u32 %v91, 4294901760
    %v2004 = vsub.f32 %v91, %v2003
    %v2005 = vand.u32 %v2004, 4294901760
    %v2006 = vsub.f32 %v2004, %v2005
    %v2007 = vand.u32 %v2006, 4294901760
    %2008 = vmatpush1.msra.mxu0 %v2007
    %2009 = vmatprep.subr.mxu0 0.0
    %v2010 = vand.u32 %v92, 4294901760
    %v2011 = vsub.f32 %v92, %v2010
    %v2012 = vand.u32 %v2011, 4294901760
    %v2013 = vsub.f32 %v2011, %v2012
    %v2014 = vand.u32 %v2013, 4294901760
    %2015 = vmatpush1.msra.mxu0 %v2014
    %2016 = vmatprep.subr.mxu0 0.0
    %v2017 = vand.u32 %v93, 4294901760
    %v2018 = vsub.f32 %v93, %v2017
    %v2019 = vand.u32 %v2018, 4294901760
    %v2020 = vsub.f32 %v2018, %v2019
    %v2021 = vand.u32 %v2020, 4294901760
    %2022 = vmatpush1.msra.mxu0 %v2021
    %2023 = vmatprep.subr.mxu0 0.0
    %v2024 = vand.u32 %v94, 4294901760
    %v2025 = vsub.f32 %v94, %v2024
    %v2026 = vand.u32 %v2025, 4294901760
    %v2027 = vsub.f32 %v2025, %v2026
    %v2028 = vand.u32 %v2027, 4294901760
    %2029 = vmatpush1.msra.mxu0 %v2028
    %2030 = vmatprep.subr.mxu0 0.0
    %v2031 = vand.u32 %v95, 4294901760
    %v2032 = vsub.f32 %v95, %v2031
    %v2033 = vand.u32 %v2032, 4294901760
    %v2034 = vsub.f32 %v2032, %v2033
    %v2035 = vand.u32 %v2034, 4294901760
    %2036 = vmatpush1.msra.mxu0 %v2035
    %2037 = vmatprep.subr.mxu0 0.0
    %v2038 = vand.u32 %v96, 4294901760
    %v2039 = vsub.f32 %v96, %v2038
    %v2040 = vand.u32 %v2039, 4294901760
    %v2041 = vsub.f32 %v2039, %v2040
    %v2042 = vand.u32 %v2041, 4294901760
    %2043 = vmatpush1.msra.mxu0 %v2042
    %2044 = vmatprep.subr.mxu0 0.0
    %v2045 = vand.u32 %v97, 4294901760
    %v2046 = vsub.f32 %v97, %v2045
    %v2047 = vand.u32 %v2046, 4294901760
    %v2048 = vsub.f32 %v2046, %v2047
    %v2049 = vand.u32 %v2048, 4294901760
    %2050 = vmatpush1.msra.mxu0 %v2049
    %2051 = vmatprep.subr.mxu0 0.0
    %v2052 = vand.u32 %v98, 4294901760
    %v2053 = vsub.f32 %v98, %v2052
    %v2054 = vand.u32 %v2053, 4294901760
    %v2055 = vsub.f32 %v2053, %v2054
    %v2056 = vand.u32 %v2055, 4294901760
    %2057 = vmatpush1.msra.mxu0 %v2056
    %2058 = vmatprep.subr.mxu0 0.0
    %v2059 = vand.u32 %v99, 4294901760
    %v2060 = vsub.f32 %v99, %v2059
    %v2061 = vand.u32 %v2060, 4294901760
    %v2062 = vsub.f32 %v2060, %v2061
    %v2063 = vand.u32 %v2062, 4294901760
    %2064 = vmatpush1.msra.mxu0 %v2063
    %2065 = vmatprep.subr.mxu0 0.0
    %v2066 = vand.u32 %v100, 4294901760
    %v2067 = vsub.f32 %v100, %v2066
    %v2068 = vand.u32 %v2067, 4294901760
    %v2069 = vsub.f32 %v2067, %v2068
    %v2070 = vand.u32 %v2069, 4294901760
    %2071 = vmatpush1.msra.mxu0 %v2070
    %2072 = vmatprep.subr.mxu0 0.0
    %v2073 = vand.u32 %v101, 4294901760
    %v2074 = vsub.f32 %v101, %v2073
    %v2075 = vand.u32 %v2074, 4294901760
    %v2076 = vsub.f32 %v2074, %v2075
    %v2077 = vand.u32 %v2076, 4294901760
    %2078 = vmatpush1.msra.mxu0 %v2077
    %2079 = vmatprep.subr.mxu0 0.0
    %v2080 = vand.u32 %v102, 4294901760
    %v2081 = vsub.f32 %v102, %v2080
    %v2082 = vand.u32 %v2081, 4294901760
    %v2083 = vsub.f32 %v2081, %v2082
    %v2084 = vand.u32 %v2083, 4294901760
    %2085 = vmatpush1.msra.mxu0 %v2084
    %2086 = vmatprep.subr.mxu0 0.0
    %v2087 = vand.u32 %v103, 4294901760
    %v2088 = vsub.f32 %v103, %v2087
    %v2089 = vand.u32 %v2088, 4294901760
    %v2090 = vsub.f32 %v2088, %v2089
    %v2091 = vand.u32 %v2090, 4294901760
    %2092 = vmatpush1.msra.mxu0 %v2091
    %2093 = vmatprep.subr.mxu0 0.0
    %v2094 = vand.u32 %v104, 4294901760
    %v2095 = vsub.f32 %v104, %v2094
    %v2096 = vand.u32 %v2095, 4294901760
    %v2097 = vsub.f32 %v2095, %v2096
    %v2098 = vand.u32 %v2097, 4294901760
    %2099 = vmatpush1.msra.mxu0 %v2098
    %2100 = vmatprep.subr.mxu0 0.0
    %v2101 = vand.u32 %v105, 4294901760
    %v2102 = vsub.f32 %v105, %v2101
    %v2103 = vand.u32 %v2102, 4294901760
    %v2104 = vsub.f32 %v2102, %v2103
    %v2105 = vand.u32 %v2104, 4294901760
    %2106 = vmatpush1.msra.mxu0 %v2105
    %2107 = vmatprep.subr.mxu0 0.0
    %v2108 = vand.u32 %v106, 4294901760
    %v2109 = vsub.f32 %v106, %v2108
    %v2110 = vand.u32 %v2109, 4294901760
    %v2111 = vsub.f32 %v2109, %v2110
    %v2112 = vand.u32 %v2111, 4294901760
    %2113 = vmatpush1.msra.mxu0 %v2112
    %2114 = vmatprep.subr.mxu0 0.0
    %v2115 = vand.u32 %v107, 4294901760
    %v2116 = vsub.f32 %v107, %v2115
    %v2117 = vand.u32 %v2116, 4294901760
    %v2118 = vsub.f32 %v2116, %v2117
    %v2119 = vand.u32 %v2118, 4294901760
    %2120 = vmatpush1.msra.mxu0 %v2119
    %2121 = vmatprep.subr.mxu0 0.0
    %v2122 = vand.u32 %v108, 4294901760
    %v2123 = vsub.f32 %v108, %v2122
    %v2124 = vand.u32 %v2123, 4294901760
    %v2125 = vsub.f32 %v2123, %v2124
    %v2126 = vand.u32 %v2125, 4294901760
    %2127 = vmatpush1.msra.mxu0 %v2126
    %2128 = vmatprep.subr.mxu0 0.0
    %v2129 = vand.u32 %v109, 4294901760
    %v2130 = vsub.f32 %v109, %v2129
    %v2131 = vand.u32 %v2130, 4294901760
    %v2132 = vsub.f32 %v2130, %v2131
    %v2133 = vand.u32 %v2132, 4294901760
    %2134 = vmatpush1.msra.mxu0 %v2133
    %2135 = vmatprep.subr.mxu0 0.0
    %v2136 = vand.u32 %v110, 4294901760
    %v2137 = vsub.f32 %v110, %v2136
    %v2138 = vand.u32 %v2137, 4294901760
    %v2139 = vsub.f32 %v2137, %v2138
    %v2140 = vand.u32 %v2139, 4294901760
    %2141 = vmatpush1.msra.mxu0 %v2140
    %2142 = vmatprep.subr.mxu0 0.0
    %v2143 = vand.u32 %v111, 4294901760
    %v2144 = vsub.f32 %v111, %v2143
    %v2145 = vand.u32 %v2144, 4294901760
    %v2146 = vsub.f32 %v2144, %v2145
    %v2147 = vand.u32 %v2146, 4294901760
    %2148 = vmatpush1.msra.mxu0 %v2147
    %2149 = vmatprep.subr.mxu0 0.0
    %v2150 = vand.u32 %v112, 4294901760
    %v2151 = vsub.f32 %v112, %v2150
    %v2152 = vand.u32 %v2151, 4294901760
    %v2153 = vsub.f32 %v2151, %v2152
    %v2154 = vand.u32 %v2153, 4294901760
    %2155 = vmatpush1.msra.mxu0 %v2154
    %2156 = vmatprep.subr.mxu0 0.0
    %v2157 = vand.u32 %v113, 4294901760
    %v2158 = vsub.f32 %v113, %v2157
    %v2159 = vand.u32 %v2158, 4294901760
    %v2160 = vsub.f32 %v2158, %v2159
    %v2161 = vand.u32 %v2160, 4294901760
    %2162 = vmatpush1.msra.mxu0 %v2161
    %2163 = vmatprep.subr.mxu0 0.0
    %v2164 = vand.u32 %v114, 4294901760
    %v2165 = vsub.f32 %v114, %v2164
    %v2166 = vand.u32 %v2165, 4294901760
    %v2167 = vsub.f32 %v2165, %v2166
    %v2168 = vand.u32 %v2167, 4294901760
    %2169 = vmatpush1.msra.mxu0 %v2168
    %2170 = vmatprep.subr.mxu0 0.0
    %v2171 = vand.u32 %v115, 4294901760
    %v2172 = vsub.f32 %v115, %v2171
    %v2173 = vand.u32 %v2172, 4294901760
    %v2174 = vsub.f32 %v2172, %v2173
    %v2175 = vand.u32 %v2174, 4294901760
    %2176 = vmatpush1.msra.mxu0 %v2175
    %2177 = vmatprep.subr.mxu0 0.0
    %v2178 = vand.u32 %v116, 4294901760
    %v2179 = vsub.f32 %v116, %v2178
    %v2180 = vand.u32 %v2179, 4294901760
    %v2181 = vsub.f32 %v2179, %v2180
    %v2182 = vand.u32 %v2181, 4294901760
    %2183 = vmatpush1.msra.mxu0 %v2182
    %2184 = vmatprep.subr.mxu0 0.0
    %v2185 = vand.u32 %v117, 4294901760
    %v2186 = vsub.f32 %v117, %v2185
    %v2187 = vand.u32 %v2186, 4294901760
    %v2188 = vsub.f32 %v2186, %v2187
    %v2189 = vand.u32 %v2188, 4294901760
    %2190 = vmatpush1.msra.mxu0 %v2189
    %v2191 = vand.u32 %v20, 4294901760
    %2192 = vmatprep.mubr.f32.mxu0 %v2191
    %v2193 = vand.u32 %v19, 4294901760
    %2194 = vmatmul.mubr.f32.gmra.mrb[0].mxu0 %v2193
    %v2195 = vpop.f32.mrb[0].mxu0
    %v2196 = vadd.f32 %v1964, %v2195
    %v2197 = vpop.f32.mrb[0].mxu0
    %2198 = vdwg.mxu0
    %2199 = vmatprep.subr.mxu0 0.0
    %v2200 = vand.u32 %v86, 4294901760
    %v2201 = vsub.f32 %v86, %v2200
    %2202 = vmatpush1.msra.mxu0 %v2201
    %2203 = vmatprep.subr.mxu0 0.0
    %v2204 = vand.u32 %v87, 4294901760
    %v2205 = vsub.f32 %v87, %v2204
    %2206 = vmatpush1.msra.mxu0 %v2205
    %2207 = vmatprep.subr.mxu0 0.0
    %v2208 = vand.u32 %v88, 4294901760
    %v2209 = vsub.f32 %v88, %v2208
    %2210 = vmatpush1.msra.mxu0 %v2209
    %2211 = vmatprep.subr.mxu0 0.0
    %v2212 = vand.u32 %v89, 4294901760
    %v2213 = vsub.f32 %v89, %v2212
    %2214 = vmatpush1.msra.mxu0 %v2213
    %2215 = vmatprep.subr.mxu0 0.0
    %v2216 = vand.u32 %v90, 4294901760
    %v2217 = vsub.f32 %v90, %v2216
    %2218 = vmatpush1.msra.mxu0 %v2217
    %2219 = vmatprep.subr.mxu0 0.0
    %v2220 = vand.u32 %v91, 4294901760
    %v2221 = vsub.f32 %v91, %v2220
    %2222 = vmatpush1.msra.mxu0 %v2221
    %2223 = vmatprep.subr.mxu0 0.0
    %v2224 = vand.u32 %v92, 4294901760
    %v2225 = vsub.f32 %v92, %v2224
    %2226 = vmatpush1.msra.mxu0 %v2225
    %2227 = vmatprep.subr.mxu0 0.0
    %v2228 = vand.u32 %v93, 4294901760
    %v2229 = vsub.f32 %v93, %v2228
    %2230 = vmatpush1.msra.mxu0 %v2229
    %2231 = vmatprep.subr.mxu0 0.0
    %v2232 = vand.u32 %v94, 4294901760
    %v2233 = vsub.f32 %v94, %v2232
    %2234 = vmatpush1.msra.mxu0 %v2233
    %2235 = vmatprep.subr.mxu0 0.0
    %v2236 = vand.u32 %v95, 4294901760
    %v2237 = vsub.f32 %v95, %v2236
    %2238 = vmatpush1.msra.mxu0 %v2237
    %2239 = vmatprep.subr.mxu0 0.0
    %v2240 = vand.u32 %v96, 4294901760
    %v2241 = vsub.f32 %v96, %v2240
    %2242 = vmatpush1.msra.mxu0 %v2241
    %2243 = vmatprep.subr.mxu0 0.0
    %v2244 = vand.u32 %v97, 4294901760
    %v2245 = vsub.f32 %v97, %v2244
    %2246 = vmatpush1.msra.mxu0 %v2245
    %2247 = vmatprep.subr.mxu0 0.0
    %v2248 = vand.u32 %v98, 4294901760
    %v2249 = vsub.f32 %v98, %v2248
    %2250 = vmatpush1.msra.mxu0 %v2249
    %2251 = vmatprep.subr.mxu0 0.0
    %v2252 = vand.u32 %v99, 4294901760
    %v2253 = vsub.f32 %v99, %v2252
    %2254 = vmatpush1.msra.mxu0 %v2253
    %2255 = vmatprep.subr.mxu0 0.0
    %v2256 = vand.u32 %v100, 4294901760
    %v2257 = vsub.f32 %v100, %v2256
    %2258 = vmatpush1.msra.mxu0 %v2257
    %2259 = vmatprep.subr.mxu0 0.0
    %v2260 = vand.u32 %v101, 4294901760
    %v2261 = vsub.f32 %v101, %v2260
    %2262 = vmatpush1.msra.mxu0 %v2261
    %2263 = vmatprep.subr.mxu0 0.0
    %v2264 = vand.u32 %v102, 4294901760
    %v2265 = vsub.f32 %v102, %v2264
    %2266 = vmatpush1.msra.mxu0 %v2265
    %2267 = vmatprep.subr.mxu0 0.0
    %v2268 = vand.u32 %v103, 4294901760
    %v2269 = vsub.f32 %v103, %v2268
    %2270 = vmatpush1.msra.mxu0 %v2269
    %2271 = vmatprep.subr.mxu0 0.0
    %v2272 = vand.u32 %v104, 4294901760
    %v2273 = vsub.f32 %v104, %v2272
    %2274 = vmatpush1.msra.mxu0 %v2273
    %2275 = vmatprep.subr.mxu0 0.0
    %v2276 = vand.u32 %v105, 4294901760
    %v2277 = vsub.f32 %v105, %v2276
    %2278 = vmatpush1.msra.mxu0 %v2277
    %2279 = vmatprep.subr.mxu0 0.0
    %v2280 = vand.u32 %v106, 4294901760
    %v2281 = vsub.f32 %v106, %v2280
    %2282 = vmatpush1.msra.mxu0 %v2281
    %2283 = vmatprep.subr.mxu0 0.0
    %v2284 = vand.u32 %v107, 4294901760
    %v2285 = vsub.f32 %v107, %v2284
    %2286 = vmatpush1.msra.mxu0 %v2285
    %2287 = vmatprep.subr.mxu0 0.0
    %v2288 = vand.u32 %v108, 4294901760
    %v2289 = vsub.f32 %v108, %v2288
    %2290 = vmatpush1.msra.mxu0 %v2289
    %2291 = vmatprep.subr.mxu0 0.0
    %v2292 = vand.u32 %v109, 4294901760
    %v2293 = vsub.f32 %v109, %v2292
    %2294 = vmatpush1.msra.mxu0 %v2293
    %2295 = vmatprep.subr.mxu0 0.0
    %v2296 = vand.u32 %v110, 4294901760
    %v2297 = vsub.f32 %v110, %v2296
    %2298 = vmatpush1.msra.mxu0 %v2297
    %2299 = vmatprep.subr.mxu0 0.0
    %v2300 = vand.u32 %v111, 4294901760
    %v2301 = vsub.f32 %v111, %v2300
    %2302 = vmatpush1.msra.mxu0 %v2301
    %2303 = vmatprep.subr.mxu0 0.0
    %v2304 = vand.u32 %v112, 4294901760
    %v2305 = vsub.f32 %v112, %v2304
    %2306 = vmatpush1.msra.mxu0 %v2305
    %2307 = vmatprep.subr.mxu0 0.0
    %v2308 = vand.u32 %v113, 4294901760
    %v2309 = vsub.f32 %v113, %v2308
    %2310 = vmatpush1.msra.mxu0 %v2309
    %2311 = vmatprep.subr.mxu0 0.0
    %v2312 = vand.u32 %v114, 4294901760
    %v2313 = vsub.f32 %v114, %v2312
    %2314 = vmatpush1.msra.mxu0 %v2313
    %2315 = vmatprep.subr.mxu0 0.0
    %v2316 = vand.u32 %v115, 4294901760
    %v2317 = vsub.f32 %v115, %v2316
    %2318 = vmatpush1.msra.mxu0 %v2317
    %2319 = vmatprep.subr.mxu0 0.0
    %v2320 = vand.u32 %v116, 4294901760
    %v2321 = vsub.f32 %v116, %v2320
    %2322 = vmatpush1.msra.mxu0 %v2321
    %2323 = vmatprep.subr.mxu0 0.0
    %v2324 = vand.u32 %v117, 4294901760
    %v2325 = vsub.f32 %v117, %v2324
    %2326 = vmatpush1.msra.mxu0 %v2325
    %v2327 = vand.u32 %v20, 4294901760
    %v2328 = vsub.f32 %v20, %v2327
    %2329 = vmatprep.mubr.f32.mxu0 %v2328
    %v2330 = vand.u32 %v19, 4294901760
    %v2331 = vsub.f32 %v19, %v2330
    %2332 = vmatmul.mubr.f32.gmra.mrb[0].mxu0 %v2331
    %v2333 = vpop.f32.mrb[0].mxu0
    %v2334 = vadd.f32 %v2196, %v2333
    %v2335 = vpop.f32.mrb[0].mxu0
    %2336 = vdwg.mxu0
    %2337 = vmatprep.subr.mxu0 0.0
    %v2338 = vand.u32 %v86, 4294901760
    %2339 = vmatpush1.msra.mxu0 %v2338
    %2340 = vmatprep.subr.mxu0 0.0
    %v2341 = vand.u32 %v87, 4294901760
    %2342 = vmatpush1.msra.mxu0 %v2341
    %2343 = vmatprep.subr.mxu0 0.0
    %v2344 = vand.u32 %v88, 4294901760
    %2345 = vmatpush1.msra.mxu0 %v2344
    %2346 = vmatprep.subr.mxu0 0.0
    %v2347 = vand.u32 %v89, 4294901760
    %2348 = vmatpush1.msra.mxu0 %v2347
    %2349 = vmatprep.subr.mxu0 0.0
    %v2350 = vand.u32 %v90, 4294901760
    %2351 = vmatpush1.msra.mxu0 %v2350
    %2352 = vmatprep.subr.mxu0 0.0
    %v2353 = vand.u32 %v91, 4294901760
    %2354 = vmatpush1.msra.mxu0 %v2353
    %2355 = vmatprep.subr.mxu0 0.0
    %v2356 = vand.u32 %v92, 4294901760
    %2357 = vmatpush1.msra.mxu0 %v2356
    %2358 = vmatprep.subr.mxu0 0.0
    %v2359 = vand.u32 %v93, 4294901760
    %2360 = vmatpush1.msra.mxu0 %v2359
    %2361 = vmatprep.subr.mxu0 0.0
    %v2362 = vand.u32 %v94, 4294901760
    %2363 = vmatpush1.msra.mxu0 %v2362
    %2364 = vmatprep.subr.mxu0 0.0
    %v2365 = vand.u32 %v95, 4294901760
    %2366 = vmatpush1.msra.mxu0 %v2365
    %2367 = vmatprep.subr.mxu0 0.0
    %v2368 = vand.u32 %v96, 4294901760
    %2369 = vmatpush1.msra.mxu0 %v2368
    %2370 = vmatprep.subr.mxu0 0.0
    %v2371 = vand.u32 %v97, 4294901760
    %2372 = vmatpush1.msra.mxu0 %v2371
    %2373 = vmatprep.subr.mxu0 0.0
    %v2374 = vand.u32 %v98, 4294901760
    %2375 = vmatpush1.msra.mxu0 %v2374
    %2376 = vmatprep.subr.mxu0 0.0
    %v2377 = vand.u32 %v99, 4294901760
    %2378 = vmatpush1.msra.mxu0 %v2377
    %2379 = vmatprep.subr.mxu0 0.0
    %v2380 = vand.u32 %v100, 4294901760
    %2381 = vmatpush1.msra.mxu0 %v2380
    %2382 = vmatprep.subr.mxu0 0.0
    %v2383 = vand.u32 %v101, 4294901760
    %2384 = vmatpush1.msra.mxu0 %v2383
    %2385 = vmatprep.subr.mxu0 0.0
    %v2386 = vand.u32 %v102, 4294901760
    %2387 = vmatpush1.msra.mxu0 %v2386
    %2388 = vmatprep.subr.mxu0 0.0
    %v2389 = vand.u32 %v103, 4294901760
    %2390 = vmatpush1.msra.mxu0 %v2389
    %2391 = vmatprep.subr.mxu0 0.0
    %v2392 = vand.u32 %v104, 4294901760
    %2393 = vmatpush1.msra.mxu0 %v2392
    %2394 = vmatprep.subr.mxu0 0.0
    %v2395 = vand.u32 %v105, 4294901760
    %2396 = vmatpush1.msra.mxu0 %v2395
    %2397 = vmatprep.subr.mxu0 0.0
    %v2398 = vand.u32 %v106, 4294901760
    %2399 = vmatpush1.msra.mxu0 %v2398
    %2400 = vmatprep.subr.mxu0 0.0
    %v2401 = vand.u32 %v107, 4294901760
    %2402 = vmatpush1.msra.mxu0 %v2401
    %2403 = vmatprep.subr.mxu0 0.0
    %v2404 = vand.u32 %v108, 4294901760
    %2405 = vmatpush1.msra.mxu0 %v2404
    %2406 = vmatprep.subr.mxu0 0.0
    %v2407 = vand.u32 %v109, 4294901760
    %2408 = vmatpush1.msra.mxu0 %v2407
    %2409 = vmatprep.subr.mxu0 0.0
    %v2410 = vand.u32 %v110, 4294901760
    %2411 = vmatpush1.msra.mxu0 %v2410
    %2412 = vmatprep.subr.mxu0 0.0
    %v2413 = vand.u32 %v111, 4294901760
    %2414 = vmatpush1.msra.mxu0 %v2413
    %2415 = vmatprep.subr.mxu0 0.0
    %v2416 = vand.u32 %v112, 4294901760
    %2417 = vmatpush1.msra.mxu0 %v2416
    %2418 = vmatprep.subr.mxu0 0.0
    %v2419 = vand.u32 %v113, 4294901760
    %2420 = vmatpush1.msra.mxu0 %v2419
    %2421 = vmatprep.subr.mxu0 0.0
    %v2422 = vand.u32 %v114, 4294901760
    %2423 = vmatpush1.msra.mxu0 %v2422
    %2424 = vmatprep.subr.mxu0 0.0
    %v2425 = vand.u32 %v115, 4294901760
    %2426 = vmatpush1.msra.mxu0 %v2425
    %2427 = vmatprep.subr.mxu0 0.0
    %v2428 = vand.u32 %v116, 4294901760
    %2429 = vmatpush1.msra.mxu0 %v2428
    %2430 = vmatprep.subr.mxu0 0.0
    %v2431 = vand.u32 %v117, 4294901760
    %2432 = vmatpush1.msra.mxu0 %v2431
    %v2433 = vand.u32 %v20, 4294901760
    %v2434 = vsub.f32 %v20, %v2433
    %v2435 = vand.u32 %v2434, 4294901760
    %2436 = vmatprep.mubr.f32.mxu0 %v2435
    %v2437 = vand.u32 %v19, 4294901760
    %v2438 = vsub.f32 %v19, %v2437
    %v2439 = vand.u32 %v2438, 4294901760
    %2440 = vmatmul.mubr.f32.gmra.mrb[0].mxu0 %v2439
    %v2441 = vpop.f32.mrb[0].mxu0
    %v2442 = vadd.f32 %v2334, %v2441
    %v2443 = vpop.f32.mrb[0].mxu0
    %2444 = vdwg.mxu0
    %2445 = vmatprep.subr.mxu0 0.0
    %v2446 = vand.u32 %v86, 4294901760
    %v2447 = vsub.f32 %v86, %v2446
    %v2448 = vand.u32 %v2447, 4294901760
    %2449 = vmatpush1.msra.mxu0 %v2448
    %2450 = vmatprep.subr.mxu0 0.0
    %v2451 = vand.u32 %v87, 4294901760
    %v2452 = vsub.f32 %v87, %v2451
    %v2453 = vand.u32 %v2452, 4294901760
    %2454 = vmatpush1.msra.mxu0 %v2453
    %2455 = vmatprep.subr.mxu0 0.0
    %v2456 = vand.u32 %v88, 4294901760
    %v2457 = vsub.f32 %v88, %v2456
    %v2458 = vand.u32 %v2457, 4294901760
    %2459 = vmatpush1.msra.mxu0 %v2458
    %2460 = vmatprep.subr.mxu0 0.0
    %v2461 = vand.u32 %v89, 4294901760
    %v2462 = vsub.f32 %v89, %v2461
    %v2463 = vand.u32 %v2462, 4294901760
    %2464 = vmatpush1.msra.mxu0 %v2463
    %2465 = vmatprep.subr.mxu0 0.0
    %v2466 = vand.u32 %v90, 4294901760
    %v2467 = vsub.f32 %v90, %v2466
    %v2468 = vand.u32 %v2467, 4294901760
    %2469 = vmatpush1.msra.mxu0 %v2468
    %2470 = vmatprep.subr.mxu0 0.0
    %v2471 = vand.u32 %v91, 4294901760
    %v2472 = vsub.f32 %v91, %v2471
    %v2473 = vand.u32 %v2472, 4294901760
    %2474 = vmatpush1.msra.mxu0 %v2473
    %2475 = vmatprep.subr.mxu0 0.0
    %v2476 = vand.u32 %v92, 4294901760
    %v2477 = vsub.f32 %v92, %v2476
    %v2478 = vand.u32 %v2477, 4294901760
    %2479 = vmatpush1.msra.mxu0 %v2478
    %2480 = vmatprep.subr.mxu0 0.0
    %v2481 = vand.u32 %v93, 4294901760
    %v2482 = vsub.f32 %v93, %v2481
    %v2483 = vand.u32 %v2482, 4294901760
    %2484 = vmatpush1.msra.mxu0 %v2483
    %2485 = vmatprep.subr.mxu0 0.0
    %v2486 = vand.u32 %v94, 4294901760
    %v2487 = vsub.f32 %v94, %v2486
    %v2488 = vand.u32 %v2487, 4294901760
    %2489 = vmatpush1.msra.mxu0 %v2488
    %2490 = vmatprep.subr.mxu0 0.0
    %v2491 = vand.u32 %v95, 4294901760
    %v2492 = vsub.f32 %v95, %v2491
    %v2493 = vand.u32 %v2492, 4294901760
    %2494 = vmatpush1.msra.mxu0 %v2493
    %2495 = vmatprep.subr.mxu0 0.0
    %v2496 = vand.u32 %v96, 4294901760
    %v2497 = vsub.f32 %v96, %v2496
    %v2498 = vand.u32 %v2497, 4294901760
    %2499 = vmatpush1.msra.mxu0 %v2498
    %2500 = vmatprep.subr.mxu0 0.0
    %v2501 = vand.u32 %v97, 4294901760
    %v2502 = vsub.f32 %v97, %v2501
    %v2503 = vand.u32 %v2502, 4294901760
    %2504 = vmatpush1.msra.mxu0 %v2503
    %2505 = vmatprep.subr.mxu0 0.0
    %v2506 = vand.u32 %v98, 4294901760
    %v2507 = vsub.f32 %v98, %v2506
    %v2508 = vand.u32 %v2507, 4294901760
    %2509 = vmatpush1.msra.mxu0 %v2508
    %2510 = vmatprep.subr.mxu0 0.0
    %v2511 = vand.u32 %v99, 4294901760
    %v2512 = vsub.f32 %v99, %v2511
    %v2513 = vand.u32 %v2512, 4294901760
    %2514 = vmatpush1.msra.mxu0 %v2513
    %2515 = vmatprep.subr.mxu0 0.0
    %v2516 = vand.u32 %v100, 4294901760
    %v2517 = vsub.f32 %v100, %v2516
    %v2518 = vand.u32 %v2517, 4294901760
    %2519 = vmatpush1.msra.mxu0 %v2518
    %2520 = vmatprep.subr.mxu0 0.0
    %v2521 = vand.u32 %v101, 4294901760
    %v2522 = vsub.f32 %v101, %v2521
    %v2523 = vand.u32 %v2522, 4294901760
    %2524 = vmatpush1.msra.mxu0 %v2523
    %2525 = vmatprep.subr.mxu0 0.0
    %v2526 = vand.u32 %v102, 4294901760
    %v2527 = vsub.f32 %v102, %v2526
    %v2528 = vand.u32 %v2527, 4294901760
    %2529 = vmatpush1.msra.mxu0 %v2528
    %2530 = vmatprep.subr.mxu0 0.0
    %v2531 = vand.u32 %v103, 4294901760
    %v2532 = vsub.f32 %v103, %v2531
    %v2533 = vand.u32 %v2532, 4294901760
    %2534 = vmatpush1.msra.mxu0 %v2533
    %2535 = vmatprep.subr.mxu0 0.0
    %v2536 = vand.u32 %v104, 4294901760
    %v2537 = vsub.f32 %v104, %v2536
    %v2538 = vand.u32 %v2537, 4294901760
    %2539 = vmatpush1.msra.mxu0 %v2538
    %2540 = vmatprep.subr.mxu0 0.0
    %v2541 = vand.u32 %v105, 4294901760
    %v2542 = vsub.f32 %v105, %v2541
    %v2543 = vand.u32 %v2542, 4294901760
    %2544 = vmatpush1.msra.mxu0 %v2543
    %2545 = vmatprep.subr.mxu0 0.0
    %v2546 = vand.u32 %v106, 4294901760
    %v2547 = vsub.f32 %v106, %v2546
    %v2548 = vand.u32 %v2547, 4294901760
    %2549 = vmatpush1.msra.mxu0 %v2548
    %2550 = vmatprep.subr.mxu0 0.0
    %v2551 = vand.u32 %v107, 4294901760
    %v2552 = vsub.f32 %v107, %v2551
    %v2553 = vand.u32 %v2552, 4294901760
    %2554 = vmatpush1.msra.mxu0 %v2553
    %2555 = vmatprep.subr.mxu0 0.0
    %v2556 = vand.u32 %v108, 4294901760
    %v2557 = vsub.f32 %v108, %v2556
    %v2558 = vand.u32 %v2557, 4294901760
    %2559 = vmatpush1.msra.mxu0 %v2558
    %2560 = vmatprep.subr.mxu0 0.0
    %v2561 = vand.u32 %v109, 4294901760
    %v2562 = vsub.f32 %v109, %v2561
    %v2563 = vand.u32 %v2562, 4294901760
    %2564 = vmatpush1.msra.mxu0 %v2563
    %2565 = vmatprep.subr.mxu0 0.0
    %v2566 = vand.u32 %v110, 4294901760
    %v2567 = vsub.f32 %v110, %v2566
    %v2568 = vand.u32 %v2567, 4294901760
    %2569 = vmatpush1.msra.mxu0 %v2568
    %2570 = vmatprep.subr.mxu0 0.0
    %v2571 = vand.u32 %v111, 4294901760
    %v2572 = vsub.f32 %v111, %v2571
    %v2573 = vand.u32 %v2572, 4294901760
    %2574 = vmatpush1.msra.mxu0 %v2573
    %2575 = vmatprep.subr.mxu0 0.0
    %v2576 = vand.u32 %v112, 4294901760
    %v2577 = vsub.f32 %v112, %v2576
    %v2578 = vand.u32 %v2577, 4294901760
    %2579 = vmatpush1.msra.mxu0 %v2578
    %2580 = vmatprep.subr.mxu0 0.0
    %v2581 = vand.u32 %v113, 4294901760
    %v2582 = vsub.f32 %v113, %v2581
    %v2583 = vand.u32 %v2582, 4294901760
    %2584 = vmatpush1.msra.mxu0 %v2583
    %2585 = vmatprep.subr.mxu0 0.0
    %v2586 = vand.u32 %v114, 4294901760
    %v2587 = vsub.f32 %v114, %v2586
    %v2588 = vand.u32 %v2587, 4294901760
    %2589 = vmatpush1.msra.mxu0 %v2588
    %2590 = vmatprep.subr.mxu0 0.0
    %v2591 = vand.u32 %v115, 4294901760
    %v2592 = vsub.f32 %v115, %v2591
    %v2593 = vand.u32 %v2592, 4294901760
    %2594 = vmatpush1.msra.mxu0 %v2593
    %2595 = vmatprep.subr.mxu0 0.0
    %v2596 = vand.u32 %v116, 4294901760
    %v2597 = vsub.f32 %v116, %v2596
    %v2598 = vand.u32 %v2597, 4294901760
    %2599 = vmatpush1.msra.mxu0 %v2598
    %2600 = vmatprep.subr.mxu0 0.0
    %v2601 = vand.u32 %v117, 4294901760
    %v2602 = vsub.f32 %v117, %v2601
    %v2603 = vand.u32 %v2602, 4294901760
    %2604 = vmatpush1.msra.mxu0 %v2603
    %v2605 = vand.u32 %v20, 4294901760
    %2606 = vmatprep.mubr.f32.mxu0 %v2605
    %v2607 = vand.u32 %v19, 4294901760
    %2608 = vmatmul.mubr.f32.gmra.mrb[0].mxu0 %v2607
    %v2609 = vpop.f32.mrb[0].mxu0
    %v2610 = vadd.f32 %v2442, %v2609
    %v2611 = vpop.f32.mrb[0].mxu0
    %2612 = vdwg.mxu0
    %2613 = vmatprep.subr.mxu0 0.0
    %v2614 = vand.u32 %v86, 4294901760
    %2615 = vmatpush1.msra.mxu0 %v2614
    %2616 = vmatprep.subr.mxu0 0.0
    %v2617 = vand.u32 %v87, 4294901760
    %2618 = vmatpush1.msra.mxu0 %v2617
    %2619 = vmatprep.subr.mxu0 0.0
    %v2620 = vand.u32 %v88, 4294901760
    %2621 = vmatpush1.msra.mxu0 %v2620
    %2622 = vmatprep.subr.mxu0 0.0
    %v2623 = vand.u32 %v89, 4294901760
    %2624 = vmatpush1.msra.mxu0 %v2623
    %2625 = vmatprep.subr.mxu0 0.0
    %v2626 = vand.u32 %v90, 4294901760
    %2627 = vmatpush1.msra.mxu0 %v2626
    %2628 = vmatprep.subr.mxu0 0.0
    %v2629 = vand.u32 %v91, 4294901760
    %2630 = vmatpush1.msra.mxu0 %v2629
    %2631 = vmatprep.subr.mxu0 0.0
    %v2632 = vand.u32 %v92, 4294901760
    %2633 = vmatpush1.msra.mxu0 %v2632
    %2634 = vmatprep.subr.mxu0 0.0
    %v2635 = vand.u32 %v93, 4294901760
    %2636 = vmatpush1.msra.mxu0 %v2635
    %2637 = vmatprep.subr.mxu0 0.0
    %v2638 = vand.u32 %v94, 4294901760
    %2639 = vmatpush1.msra.mxu0 %v2638
    %2640 = vmatprep.subr.mxu0 0.0
    %v2641 = vand.u32 %v95, 4294901760
    %2642 = vmatpush1.msra.mxu0 %v2641
    %2643 = vmatprep.subr.mxu0 0.0
    %v2644 = vand.u32 %v96, 4294901760
    %2645 = vmatpush1.msra.mxu0 %v2644
    %2646 = vmatprep.subr.mxu0 0.0
    %v2647 = vand.u32 %v97, 4294901760
    %2648 = vmatpush1.msra.mxu0 %v2647
    %2649 = vmatprep.subr.mxu0 0.0
    %v2650 = vand.u32 %v98, 4294901760
    %2651 = vmatpush1.msra.mxu0 %v2650
    %2652 = vmatprep.subr.mxu0 0.0
    %v2653 = vand.u32 %v99, 4294901760
    %2654 = vmatpush1.msra.mxu0 %v2653
    %2655 = vmatprep.subr.mxu0 0.0
    %v2656 = vand.u32 %v100, 4294901760
    %2657 = vmatpush1.msra.mxu0 %v2656
    %2658 = vmatprep.subr.mxu0 0.0
    %v2659 = vand.u32 %v101, 4294901760
    %2660 = vmatpush1.msra.mxu0 %v2659
    %2661 = vmatprep.subr.mxu0 0.0
    %v2662 = vand.u32 %v102, 4294901760
    %2663 = vmatpush1.msra.mxu0 %v2662
    %2664 = vmatprep.subr.mxu0 0.0
    %v2665 = vand.u32 %v103, 4294901760
    %2666 = vmatpush1.msra.mxu0 %v2665
    %2667 = vmatprep.subr.mxu0 0.0
    %v2668 = vand.u32 %v104, 4294901760
    %2669 = vmatpush1.msra.mxu0 %v2668
    %2670 = vmatprep.subr.mxu0 0.0
    %v2671 = vand.u32 %v105, 4294901760
    %2672 = vmatpush1.msra.mxu0 %v2671
    %2673 = vmatprep.subr.mxu0 0.0
    %v2674 = vand.u32 %v106, 4294901760
    %2675 = vmatpush1.msra.mxu0 %v2674
    %2676 = vmatprep.subr.mxu0 0.0
    %v2677 = vand.u32 %v107, 4294901760
    %2678 = vmatpush1.msra.mxu0 %v2677
    %2679 = vmatprep.subr.mxu0 0.0
    %v2680 = vand.u32 %v108, 4294901760
    %2681 = vmatpush1.msra.mxu0 %v2680
    %2682 = vmatprep.subr.mxu0 0.0
    %v2683 = vand.u32 %v109, 4294901760
    %2684 = vmatpush1.msra.mxu0 %v2683
    %2685 = vmatprep.subr.mxu0 0.0
    %v2686 = vand.u32 %v110, 4294901760
    %2687 = vmatpush1.msra.mxu0 %v2686
    %2688 = vmatprep.subr.mxu0 0.0
    %v2689 = vand.u32 %v111, 4294901760
    %2690 = vmatpush1.msra.mxu0 %v2689
    %2691 = vmatprep.subr.mxu0 0.0
    %v2692 = vand.u32 %v112, 4294901760
    %2693 = vmatpush1.msra.mxu0 %v2692
    %2694 = vmatprep.subr.mxu0 0.0
    %v2695 = vand.u32 %v113, 4294901760
    %2696 = vmatpush1.msra.mxu0 %v2695
    %2697 = vmatprep.subr.mxu0 0.0
    %v2698 = vand.u32 %v114, 4294901760
    %2699 = vmatpush1.msra.mxu0 %v2698
    %2700 = vmatprep.subr.mxu0 0.0
    %v2701 = vand.u32 %v115, 4294901760
    %2702 = vmatpush1.msra.mxu0 %v2701
    %2703 = vmatprep.subr.mxu0 0.0
    %v2704 = vand.u32 %v116, 4294901760
    %2705 = vmatpush1.msra.mxu0 %v2704
    %2706 = vmatprep.subr.mxu0 0.0
    %v2707 = vand.u32 %v117, 4294901760
    %2708 = vmatpush1.msra.mxu0 %v2707
    %v2709 = vand.u32 %v20, 4294901760
    %2710 = vmatprep.mubr.f32.mxu0 %v2709
    %v2711 = vand.u32 %v19, 4294901760
    %2712 = vmatmul.mubr.f32.gmra.mrb[0].mxu0 %v2711
    %v2713 = vpop.f32.mrb[0].mxu0
    %v2714 = vadd.f32 %v2610, %v2713
    %v2715 = vpop.f32.mrb[0].mxu0
    %2716 = vdwg.mxu0
    %2717 = vmatprep.subr.mxu0 0.0
    %v2718 = vand.u32 %v118, 4294901760
    %2719 = vmatpush1.msra.mxu0 %v2718
    %2720 = vmatprep.subr.mxu0 0.0
    %v2721 = vand.u32 %v119, 4294901760
    %2722 = vmatpush1.msra.mxu0 %v2721
    %2723 = vmatprep.subr.mxu0 0.0
    %2724 = vmatpush1.msra.mxu0 0.0
    %2725 = vmatprep.subr.mxu0 0.0
    %2726 = vmatpush1.msra.mxu0 0.0
    %2727 = vmatprep.subr.mxu0 0.0
    %2728 = vmatpush1.msra.mxu0 0.0
    %2729 = vmatprep.subr.mxu0 0.0
    %2730 = vmatpush1.msra.mxu0 0.0
    %2731 = vmatprep.subr.mxu0 0.0
    %2732 = vmatpush1.msra.mxu0 0.0
    %2733 = vmatprep.subr.mxu0 0.0
    %2734 = vmatpush1.msra.mxu0 0.0
    %2735 = vmatprep.subr.mxu0 0.0
    %2736 = vmatpush1.msra.mxu0 0.0
    %2737 = vmatprep.subr.mxu0 0.0
    %2738 = vmatpush1.msra.mxu0 0.0
    %2739 = vmatprep.subr.mxu0 0.0
    %2740 = vmatpush1.msra.mxu0 0.0
    %2741 = vmatprep.subr.mxu0 0.0
    %2742 = vmatpush1.msra.mxu0 0.0
    %2743 = vmatprep.subr.mxu0 0.0
    %2744 = vmatpush1.msra.mxu0 0.0
    %2745 = vmatprep.subr.mxu0 0.0
    %2746 = vmatpush1.msra.mxu0 0.0
    %2747 = vmatprep.subr.mxu0 0.0
    %2748 = vmatpush1.msra.mxu0 0.0
    %2749 = vmatprep.subr.mxu0 0.0
    %2750 = vmatpush1.msra.mxu0 0.0
    %2751 = vmatprep.subr.mxu0 0.0
    %2752 = vmatpush1.msra.mxu0 0.0
    %2753 = vmatprep.subr.mxu0 0.0
    %2754 = vmatpush1.msra.mxu0 0.0
    %2755 = vmatprep.subr.mxu0 0.0
    %2756 = vmatpush1.msra.mxu0 0.0
    %2757 = vmatprep.subr.mxu0 0.0
    %2758 = vmatpush1.msra.mxu0 0.0
    %2759 = vmatprep.subr.mxu0 0.0
    %2760 = vmatpush1.msra.mxu0 0.0
    %2761 = vmatprep.subr.mxu0 0.0
    %2762 = vmatpush1.msra.mxu0 0.0
    %2763 = vmatprep.subr.mxu0 0.0
    %2764 = vmatpush1.msra.mxu0 0.0
    %2765 = vmatprep.subr.mxu0 0.0
    %2766 = vmatpush1.msra.mxu0 0.0
    %2767 = vmatprep.subr.mxu0 0.0
    %2768 = vmatpush1.msra.mxu0 0.0
    %2769 = vmatprep.subr.mxu0 0.0
    %2770 = vmatpush1.msra.mxu0 0.0
    %2771 = vmatprep.subr.mxu0 0.0
    %2772 = vmatpush1.msra.mxu0 0.0
    %2773 = vmatprep.subr.mxu0 0.0
    %2774 = vmatpush1.msra.mxu0 0.0
    %2775 = vmatprep.subr.mxu0 0.0
    %2776 = vmatpush1.msra.mxu0 0.0
    %2777 = vmatprep.subr.mxu0 0.0
    %2778 = vmatpush1.msra.mxu0 0.0
    %2779 = vmatprep.subr.mxu0 0.0
    %2780 = vmatpush1.msra.mxu0 0.0
    %2781 = vmatprep.subr.mxu0 0.0
    %2782 = vmatpush1.msra.mxu0 0.0
    %2783 = vmatprep.mubr.f32.mxu0 0.0
    %v2784 = vand.u32 %v129, 4294901760
    %v2785 = vsub.f32 %v129, %v2784
    %v2786 = vand.u32 %v2785, 4294901760
    %v2787 = vsub.f32 %v2785, %v2786
    %v2788 = vand.u32 %v2787, 4294901760
    %2789 = vmatmul.mubr.f32.gmra.mrb[0].mxu0 %v2788
    %v2790 = vpop.f32.mrb[0].mxu0
    %v2791 = vadd.f32 %v2714, %v2790
    %v2792 = vpop.f32.mrb[0].mxu0
    %2793 = vdwg.mxu0
    %2794 = vmatprep.subr.mxu0 0.0
    %v2795 = vand.u32 %v118, 4294901760
    %v2796 = vsub.f32 %v118, %v2795
    %v2797 = vand.u32 %v2796, 4294901760
    %v2798 = vsub.f32 %v2796, %v2797
    %v2799 = vand.u32 %v2798, 4294901760
    %2800 = vmatpush1.msra.mxu0 %v2799
    %2801 = vmatprep.subr.mxu0 0.0
    %v2802 = vand.u32 %v119, 4294901760
    %v2803 = vsub.f32 %v119, %v2802
    %v2804 = vand.u32 %v2803, 4294901760
    %v2805 = vsub.f32 %v2803, %v2804
    %v2806 = vand.u32 %v2805, 4294901760
    %2807 = vmatpush1.msra.mxu0 %v2806
    %2808 = vmatprep.subr.mxu0 0.0
    %2809 = vmatpush1.msra.mxu0 0.0
    %2810 = vmatprep.subr.mxu0 0.0
    %2811 = vmatpush1.msra.mxu0 0.0
    %2812 = vmatprep.subr.mxu0 0.0
    %2813 = vmatpush1.msra.mxu0 0.0
    %2814 = vmatprep.subr.mxu0 0.0
    %2815 = vmatpush1.msra.mxu0 0.0
    %2816 = vmatprep.subr.mxu0 0.0
    %2817 = vmatpush1.msra.mxu0 0.0
    %2818 = vmatprep.subr.mxu0 0.0
    %2819 = vmatpush1.msra.mxu0 0.0
    %2820 = vmatprep.subr.mxu0 0.0
    %2821 = vmatpush1.msra.mxu0 0.0
    %2822 = vmatprep.subr.mxu0 0.0
    %2823 = vmatpush1.msra.mxu0 0.0
    %2824 = vmatprep.subr.mxu0 0.0
    %2825 = vmatpush1.msra.mxu0 0.0
    %2826 = vmatprep.subr.mxu0 0.0
    %2827 = vmatpush1.msra.mxu0 0.0
    %2828 = vmatprep.subr.mxu0 0.0
    %2829 = vmatpush1.msra.mxu0 0.0
    %2830 = vmatprep.subr.mxu0 0.0
    %2831 = vmatpush1.msra.mxu0 0.0
    %2832 = vmatprep.subr.mxu0 0.0
    %2833 = vmatpush1.msra.mxu0 0.0
    %2834 = vmatprep.subr.mxu0 0.0
    %2835 = vmatpush1.msra.mxu0 0.0
    %2836 = vmatprep.subr.mxu0 0.0
    %2837 = vmatpush1.msra.mxu0 0.0
    %2838 = vmatprep.subr.mxu0 0.0
    %2839 = vmatpush1.msra.mxu0 0.0
    %2840 = vmatprep.subr.mxu0 0.0
    %2841 = vmatpush1.msra.mxu0 0.0
    %2842 = vmatprep.subr.mxu0 0.0
    %2843 = vmatpush1.msra.mxu0 0.0
    %2844 = vmatprep.subr.mxu0 0.0
    %2845 = vmatpush1.msra.mxu0 0.0
    %2846 = vmatprep.subr.mxu0 0.0
    %2847 = vmatpush1.msra.mxu0 0.0
    %2848 = vmatprep.subr.mxu0 0.0
    %2849 = vmatpush1.msra.mxu0 0.0
    %2850 = vmatprep.subr.mxu0 0.0
    %2851 = vmatpush1.msra.mxu0 0.0
    %2852 = vmatprep.subr.mxu0 0.0
    %2853 = vmatpush1.msra.mxu0 0.0
    %2854 = vmatprep.subr.mxu0 0.0
    %2855 = vmatpush1.msra.mxu0 0.0
    %2856 = vmatprep.subr.mxu0 0.0
    %2857 = vmatpush1.msra.mxu0 0.0
    %2858 = vmatprep.subr.mxu0 0.0
    %2859 = vmatpush1.msra.mxu0 0.0
    %2860 = vmatprep.subr.mxu0 0.0
    %2861 = vmatpush1.msra.mxu0 0.0
    %2862 = vmatprep.subr.mxu0 0.0
    %2863 = vmatpush1.msra.mxu0 0.0
    %2864 = vmatprep.subr.mxu0 0.0
    %2865 = vmatpush1.msra.mxu0 0.0
    %2866 = vmatprep.subr.mxu0 0.0
    %2867 = vmatpush1.msra.mxu0 0.0
    %2868 = vmatprep.mubr.f32.mxu0 0.0
    %v2869 = vand.u32 %v129, 4294901760
    %2870 = vmatmul.mubr.f32.gmra.mrb[0].mxu0 %v2869
    %v2871 = vpop.f32.mrb[0].mxu0
    %v2872 = vadd.f32 %v2791, %v2871
    %v2873 = vpop.f32.mrb[0].mxu0
    %2874 = vdwg.mxu0
    %2875 = vmatprep.subr.mxu0 0.0
    %v2876 = vand.u32 %v118, 4294901760
    %v2877 = vsub.f32 %v118, %v2876
    %2878 = vmatpush1.msra.mxu0 %v2877
    %2879 = vmatprep.subr.mxu0 0.0
    %v2880 = vand.u32 %v119, 4294901760
    %v2881 = vsub.f32 %v119, %v2880
    %2882 = vmatpush1.msra.mxu0 %v2881
    %2883 = vmatprep.subr.mxu0 0.0
    %2884 = vmatpush1.msra.mxu0 0.0
    %2885 = vmatprep.subr.mxu0 0.0
    %2886 = vmatpush1.msra.mxu0 0.0
    %2887 = vmatprep.subr.mxu0 0.0
    %2888 = vmatpush1.msra.mxu0 0.0
    %2889 = vmatprep.subr.mxu0 0.0
    %2890 = vmatpush1.msra.mxu0 0.0
    %2891 = vmatprep.subr.mxu0 0.0
    %2892 = vmatpush1.msra.mxu0 0.0
    %2893 = vmatprep.subr.mxu0 0.0
    %2894 = vmatpush1.msra.mxu0 0.0
    %2895 = vmatprep.subr.mxu0 0.0
    %2896 = vmatpush1.msra.mxu0 0.0
    %2897 = vmatprep.subr.mxu0 0.0
    %2898 = vmatpush1.msra.mxu0 0.0
    %2899 = vmatprep.subr.mxu0 0.0
    %2900 = vmatpush1.msra.mxu0 0.0
    %2901 = vmatprep.subr.mxu0 0.0
    %2902 = vmatpush1.msra.mxu0 0.0
    %2903 = vmatprep.subr.mxu0 0.0
    %2904 = vmatpush1.msra.mxu0 0.0
    %2905 = vmatprep.subr.mxu0 0.0
    %2906 = vmatpush1.msra.mxu0 0.0
    %2907 = vmatprep.subr.mxu0 0.0
    %2908 = vmatpush1.msra.mxu0 0.0
    %2909 = vmatprep.subr.mxu0 0.0
    %2910 = vmatpush1.msra.mxu0 0.0
    %2911 = vmatprep.subr.mxu0 0.0
    %2912 = vmatpush1.msra.mxu0 0.0
    %2913 = vmatprep.subr.mxu0 0.0
    %2914 = vmatpush1.msra.mxu0 0.0
    %2915 = vmatprep.subr.mxu0 0.0
    %2916 = vmatpush1.msra.mxu0 0.0
    %2917 = vmatprep.subr.mxu0 0.0
    %2918 = vmatpush1.msra.mxu0 0.0
    %2919 = vmatprep.subr.mxu0 0.0
    %2920 = vmatpush1.msra.mxu0 0.0
    %2921 = vmatprep.subr.mxu0 0.0
    %2922 = vmatpush1.msra.mxu0 0.0
    %2923 = vmatprep.subr.mxu0 0.0
    %2924 = vmatpush1.msra.mxu0 0.0
    %2925 = vmatprep.subr.mxu0 0.0
    %2926 = vmatpush1.msra.mxu0 0.0
    %2927 = vmatprep.subr.mxu0 0.0
    %2928 = vmatpush1.msra.mxu0 0.0
    %2929 = vmatprep.subr.mxu0 0.0
    %2930 = vmatpush1.msra.mxu0 0.0
    %2931 = vmatprep.subr.mxu0 0.0
    %2932 = vmatpush1.msra.mxu0 0.0
    %2933 = vmatprep.subr.mxu0 0.0
    %2934 = vmatpush1.msra.mxu0 0.0
    %2935 = vmatprep.subr.mxu0 0.0
    %2936 = vmatpush1.msra.mxu0 0.0
    %2937 = vmatprep.subr.mxu0 0.0
    %2938 = vmatpush1.msra.mxu0 0.0
    %2939 = vmatprep.subr.mxu0 0.0
    %2940 = vmatpush1.msra.mxu0 0.0
    %2941 = vmatprep.subr.mxu0 0.0
    %2942 = vmatpush1.msra.mxu0 0.0
    %2943 = vmatprep.mubr.f32.mxu0 0.0
    %v2944 = vand.u32 %v129, 4294901760
    %v2945 = vsub.f32 %v129, %v2944
    %2946 = vmatmul.mubr.f32.gmra.mrb[0].mxu0 %v2945
    %v2947 = vpop.f32.mrb[0].mxu0
    %v2948 = vadd.f32 %v2872, %v2947
    %v2949 = vpop.f32.mrb[0].mxu0
    %2950 = vdwg.mxu0
    %2951 = vmatprep.subr.mxu0 0.0
    %v2952 = vand.u32 %v118, 4294901760
    %2953 = vmatpush1.msra.mxu0 %v2952
    %2954 = vmatprep.subr.mxu0 0.0
    %v2955 = vand.u32 %v119, 4294901760
    %2956 = vmatpush1.msra.mxu0 %v2955
    %2957 = vmatprep.subr.mxu0 0.0
    %2958 = vmatpush1.msra.mxu0 0.0
    %2959 = vmatprep.subr.mxu0 0.0
    %2960 = vmatpush1.msra.mxu0 0.0
    %2961 = vmatprep.subr.mxu0 0.0
    %2962 = vmatpush1.msra.mxu0 0.0
    %2963 = vmatprep.subr.mxu0 0.0
    %2964 = vmatpush1.msra.mxu0 0.0
    %2965 = vmatprep.subr.mxu0 0.0
    %2966 = vmatpush1.msra.mxu0 0.0
    %2967 = vmatprep.subr.mxu0 0.0
    %2968 = vmatpush1.msra.mxu0 0.0
    %2969 = vmatprep.subr.mxu0 0.0
    %2970 = vmatpush1.msra.mxu0 0.0
    %2971 = vmatprep.subr.mxu0 0.0
    %2972 = vmatpush1.msra.mxu0 0.0
    %2973 = vmatprep.subr.mxu0 0.0
    %2974 = vmatpush1.msra.mxu0 0.0
    %2975 = vmatprep.subr.mxu0 0.0
    %2976 = vmatpush1.msra.mxu0 0.0
    %2977 = vmatprep.subr.mxu0 0.0
    %2978 = vmatpush1.msra.mxu0 0.0
    %2979 = vmatprep.subr.mxu0 0.0
    %2980 = vmatpush1.msra.mxu0 0.0
    %2981 = vmatprep.subr.mxu0 0.0
    %2982 = vmatpush1.msra.mxu0 0.0
    %2983 = vmatprep.subr.mxu0 0.0
    %2984 = vmatpush1.msra.mxu0 0.0
    %2985 = vmatprep.subr.mxu0 0.0
    %2986 = vmatpush1.msra.mxu0 0.0
    %2987 = vmatprep.subr.mxu0 0.0
    %2988 = vmatpush1.msra.mxu0 0.0
    %2989 = vmatprep.subr.mxu0 0.0
    %2990 = vmatpush1.msra.mxu0 0.0
    %2991 = vmatprep.subr.mxu0 0.0
    %2992 = vmatpush1.msra.mxu0 0.0
    %2993 = vmatprep.subr.mxu0 0.0
    %2994 = vmatpush1.msra.mxu0 0.0
    %2995 = vmatprep.subr.mxu0 0.0
    %2996 = vmatpush1.msra.mxu0 0.0
    %2997 = vmatprep.subr.mxu0 0.0
    %2998 = vmatpush1.msra.mxu0 0.0
    %2999 = vmatprep.subr.mxu0 0.0
    %3000 = vmatpush1.msra.mxu0 0.0
    %3001 = vmatprep.subr.mxu0 0.0
    %3002 = vmatpush1.msra.mxu0 0.0
    %3003 = vmatprep.subr.mxu0 0.0
    %3004 = vmatpush1.msra.mxu0 0.0
    %3005 = vmatprep.subr.mxu0 0.0
    %3006 = vmatpush1.msra.mxu0 0.0
    %3007 = vmatprep.subr.mxu0 0.0
    %3008 = vmatpush1.msra.mxu0 0.0
    %3009 = vmatprep.subr.mxu0 0.0
    %3010 = vmatpush1.msra.mxu0 0.0
    %3011 = vmatprep.subr.mxu0 0.0
    %3012 = vmatpush1.msra.mxu0 0.0
    %3013 = vmatprep.subr.mxu0 0.0
    %3014 = vmatpush1.msra.mxu0 0.0
    %3015 = vmatprep.subr.mxu0 0.0
    %3016 = vmatpush1.msra.mxu0 0.0
    %3017 = vmatprep.mubr.f32.mxu0 0.0
    %v3018 = vand.u32 %v129, 4294901760
    %v3019 = vsub.f32 %v129, %v3018
    %v3020 = vand.u32 %v3019, 4294901760
    %3021 = vmatmul.mubr.f32.gmra.mrb[0].mxu0 %v3020
    %v3022 = vpop.f32.mrb[0].mxu0
    %v3023 = vadd.f32 %v2948, %v3022
    %v3024 = vpop.f32.mrb[0].mxu0
    %3025 = vdwg.mxu0
    %3026 = vmatprep.subr.mxu0 0.0
    %v3027 = vand.u32 %v118, 4294901760
    %v3028 = vsub.f32 %v118, %v3027
    %v3029 = vand.u32 %v3028, 4294901760
    %3030 = vmatpush1.msra.mxu0 %v3029
    %3031 = vmatprep.subr.mxu0 0.0
    %v3032 = vand.u32 %v119, 4294901760
    %v3033 = vsub.f32 %v119, %v3032
    %v3034 = vand.u32 %v3033, 4294901760
    %3035 = vmatpush1.msra.mxu0 %v3034
    %3036 = vmatprep.subr.mxu0 0.0
    %3037 = vmatpush1.msra.mxu0 0.0
    %3038 = vmatprep.subr.mxu0 0.0
    %3039 = vmatpush1.msra.mxu0 0.0
    %3040 = vmatprep.subr.mxu0 0.0
    %3041 = vmatpush1.msra.mxu0 0.0
    %3042 = vmatprep.subr.mxu0 0.0
    %3043 = vmatpush1.msra.mxu0 0.0
    %3044 = vmatprep.subr.mxu0 0.0
    %3045 = vmatpush1.msra.mxu0 0.0
    %3046 = vmatprep.subr.mxu0 0.0
    %3047 = vmatpush1.msra.mxu0 0.0
    %3048 = vmatprep.subr.mxu0 0.0
    %3049 = vmatpush1.msra.mxu0 0.0
    %3050 = vmatprep.subr.mxu0 0.0
    %3051 = vmatpush1.msra.mxu0 0.0
    %3052 = vmatprep.subr.mxu0 0.0
    %3053 = vmatpush1.msra.mxu0 0.0
    %3054 = vmatprep.subr.mxu0 0.0
    %3055 = vmatpush1.msra.mxu0 0.0
    %3056 = vmatprep.subr.mxu0 0.0
    %3057 = vmatpush1.msra.mxu0 0.0
    %3058 = vmatprep.subr.mxu0 0.0
    %3059 = vmatpush1.msra.mxu0 0.0
    %3060 = vmatprep.subr.mxu0 0.0
    %3061 = vmatpush1.msra.mxu0 0.0
    %3062 = vmatprep.subr.mxu0 0.0
    %3063 = vmatpush1.msra.mxu0 0.0
    %3064 = vmatprep.subr.mxu0 0.0
    %3065 = vmatpush1.msra.mxu0 0.0
    %3066 = vmatprep.subr.mxu0 0.0
    %3067 = vmatpush1.msra.mxu0 0.0
    %3068 = vmatprep.subr.mxu0 0.0
    %3069 = vmatpush1.msra.mxu0 0.0
    %3070 = vmatprep.subr.mxu0 0.0
    %3071 = vmatpush1.msra.mxu0 0.0
    %3072 = vmatprep.subr.mxu0 0.0
    %3073 = vmatpush1.msra.mxu0 0.0
    %3074 = vmatprep.subr.mxu0 0.0
    %3075 = vmatpush1.msra.mxu0 0.0
    %3076 = vmatprep.subr.mxu0 0.0
    %3077 = vmatpush1.msra.mxu0 0.0
    %3078 = vmatprep.subr.mxu0 0.0
    %3079 = vmatpush1.msra.mxu0 0.0
    %3080 = vmatprep.subr.mxu0 0.0
    %3081 = vmatpush1.msra.mxu0 0.0
    %3082 = vmatprep.subr.mxu0 0.0
    %3083 = vmatpush1.msra.mxu0 0.0
    %3084 = vmatprep.subr.mxu0 0.0
    %3085 = vmatpush1.msra.mxu0 0.0
    %3086 = vmatprep.subr.mxu0 0.0
    %3087 = vmatpush1.msra.mxu0 0.0
    %3088 = vmatprep.subr.mxu0 0.0
    %3089 = vmatpush1.msra.mxu0 0.0
    %3090 = vmatprep.subr.mxu0 0.0
    %3091 = vmatpush1.msra.mxu0 0.0
    %3092 = vmatprep.subr.mxu0 0.0
    %3093 = vmatpush1.msra.mxu0 0.0
    %3094 = vmatprep.subr.mxu0 0.0
    %3095 = vmatpush1.msra.mxu0 0.0
    %3096 = vmatprep.mubr.f32.mxu0 0.0
    %v3097 = vand.u32 %v129, 4294901760
    %3098 = vmatmul.mubr.f32.gmra.mrb[0].mxu0 %v3097
    %v3099 = vpop.f32.mrb[0].mxu0
    %v3100 = vadd.f32 %v3023, %v3099
    %v3101 = vpop.f32.mrb[0].mxu0
    %3102 = vdwg.mxu0
    %3103 = vmatprep.subr.mxu0 0.0
    %v3104 = vand.u32 %v118, 4294901760
    %3105 = vmatpush1.msra.mxu0 %v3104
    %3106 = vmatprep.subr.mxu0 0.0
    %v3107 = vand.u32 %v119, 4294901760
    %3108 = vmatpush1.msra.mxu0 %v3107
    %3109 = vmatprep.subr.mxu0 0.0
    %3110 = vmatpush1.msra.mxu0 0.0
    %3111 = vmatprep.subr.mxu0 0.0
    %3112 = vmatpush1.msra.mxu0 0.0
    %3113 = vmatprep.subr.mxu0 0.0
    %3114 = vmatpush1.msra.mxu0 0.0
    %3115 = vmatprep.subr.mxu0 0.0
    %3116 = vmatpush1.msra.mxu0 0.0
    %3117 = vmatprep.subr.mxu0 0.0
    %3118 = vmatpush1.msra.mxu0 0.0
    %3119 = vmatprep.subr.mxu0 0.0
    %3120 = vmatpush1.msra.mxu0 0.0
    %3121 = vmatprep.subr.mxu0 0.0
    %3122 = vmatpush1.msra.mxu0 0.0
    %3123 = vmatprep.subr.mxu0 0.0
    %3124 = vmatpush1.msra.mxu0 0.0
    %3125 = vmatprep.subr.mxu0 0.0
    %3126 = vmatpush1.msra.mxu0 0.0
    %3127 = vmatprep.subr.mxu0 0.0
    %3128 = vmatpush1.msra.mxu0 0.0
    %3129 = vmatprep.subr.mxu0 0.0
    %3130 = vmatpush1.msra.mxu0 0.0
    %3131 = vmatprep.subr.mxu0 0.0
    %3132 = vmatpush1.msra.mxu0 0.0
    %3133 = vmatprep.subr.mxu0 0.0
    %3134 = vmatpush1.msra.mxu0 0.0
    %3135 = vmatprep.subr.mxu0 0.0
    %3136 = vmatpush1.msra.mxu0 0.0
    %3137 = vmatprep.subr.mxu0 0.0
    %3138 = vmatpush1.msra.mxu0 0.0
    %3139 = vmatprep.subr.mxu0 0.0
    %3140 = vmatpush1.msra.mxu0 0.0
    %3141 = vmatprep.subr.mxu0 0.0
    %3142 = vmatpush1.msra.mxu0 0.0
    %3143 = vmatprep.subr.mxu0 0.0
    %3144 = vmatpush1.msra.mxu0 0.0
    %3145 = vmatprep.subr.mxu0 0.0
    %3146 = vmatpush1.msra.mxu0 0.0
    %3147 = vmatprep.subr.mxu0 0.0
    %3148 = vmatpush1.msra.mxu0 0.0
    %3149 = vmatprep.subr.mxu0 0.0
    %3150 = vmatpush1.msra.mxu0 0.0
    %3151 = vmatprep.subr.mxu0 0.0
    %3152 = vmatpush1.msra.mxu0 0.0
    %3153 = vmatprep.subr.mxu0 0.0
    %3154 = vmatpush1.msra.mxu0 0.0
    %3155 = vmatprep.subr.mxu0 0.0
    %3156 = vmatpush1.msra.mxu0 0.0
    %3157 = vmatprep.subr.mxu0 0.0
    %3158 = vmatpush1.msra.mxu0 0.0
    %3159 = vmatprep.subr.mxu0 0.0
    %3160 = vmatpush1.msra.mxu0 0.0
    %3161 = vmatprep.subr.mxu0 0.0
    %3162 = vmatpush1.msra.mxu0 0.0
    %3163 = vmatprep.subr.mxu0 0.0
    %3164 = vmatpush1.msra.mxu0 0.0
    %3165 = vmatprep.subr.mxu0 0.0
    %3166 = vmatpush1.msra.mxu0 0.0
    %3167 = vmatprep.subr.mxu0 0.0
    %3168 = vmatpush1.msra.mxu0 0.0
    %3169 = vmatprep.mubr.f32.mxu0 0.0
    %v3170 = vand.u32 %v129, 4294901760
    %3171 = vmatmul.mubr.f32.gmra.mrb[0].mxu0 %v3170
    %v3172 = vpop.f32.mrb[0].mxu0
    %v3173 = vadd.f32 %v3100, %v3172
    %v3174 = vpop.f32.mrb[0].mxu0
    %3175 = vdwg.mxu0
    %vm3176 = vcmask 80896
    %3177 = vst.msk [vmem:[#allocation2] sm:$0xff] %vm3176, %v3173
    // Predicated region
    $region14: #{tpu_custom_call.1} parent=1 // pred_check
      _
    $region15: #{tpu_custom_call.1} parent=1 // pred_check_branch
      %3179 = sbr.rel (0) target = $region17
    $region16: #{tpu_custom_call.1} parent=1 // pred_region
      %s3181 = ssub.s32 128, 128
      %3182 = vsyncadd [#allocation3], %s3181
      %s3184 = sshll.u32 [#allocation2], 4
      %s3185 = int_to_ptr.vmem [resolvable:$true] %s3184
      %3187 = dma.vmem_to_hbm [thread:$0]  %s3185, 128, %s3, [#allocation3]
    $region17: #{tpu_custom_call.1} parent=1 // pred_fallthru
      _
    // Predicated region
    $region18: #{tpu_custom_call.1} parent=1 // pred_check
      _
    $region19: #{tpu_custom_call.1} parent=1 // pred_check_branch
      %3189 = sbr.rel (0) target = $region21
    $region20: #{tpu_custom_call.1} parent=1 // pred_region
      %3190 = dma.done [#allocation3], 128
    $region21: #{tpu_custom_call.1} parent=1 // pred_fallthru
      _
    %3191 = vsyncpa [#allocation3], 1

</llo_original>
